<compile_context>
chip_gen: v7x
topology: tpu7x:2x2x1
jax: 0.10.0
libtpu: 0.0.40
codegen_flags: <defaults>
</compile_context>

<pallas_src>
import functools

import jax
import jax.numpy as jnp
from jax.experimental import pallas as pl
from jax.experimental.pallas import tpu as pltpu


# ---------------------------------------------------------------------------
# Fused transformer kernel: one grid step == (one batch element, one layer)
# ---------------------------------------------------------------------------
def _transformer_kernel(x_ref,                       # (1, N, D)  initial tokens
                        ln1_g_ref, ln1_b_ref,        # (1, 1, D)  f32
                        w_qkv_ref,                   # (1, D, 3*H*dh) bf16
                        w_o_ref,                     # (1, H*dh, D)   bf16
                        b_o_ref,                     # (1, 1, D)  f32
                        ln2_g_ref, ln2_b_ref,        # (1, 1, D)  f32
                        w1_ref, b1_ref,              # (1, D, mlp) bf16, (1, 1, mlp) f32
                        w2_ref, b2_ref,              # (1, mlp, D) bf16, (1, 1, D)   f32
                        o_ref,                       # (1, N, D)  VMEM-resident f32
                        *, heads, dim_head):
    layer = pl.program_id(1)

    # Load the tokens into the resident output block on the first layer; the
    # activation then stays in VMEM across the whole depth loop.
    @pl.when(layer == 0)
    def _():
        o_ref[...] = x_ref[...]

    x = o_ref[0]                                     # (N, D) f32
    inner = heads * dim_head
    scale = dim_head ** -0.5

    def layer_norm(t, g, b):
        mu = jnp.mean(t, axis=-1, keepdims=True)
        var = jnp.mean(jnp.square(t - mu), axis=-1, keepdims=True)
        return (t - mu) * jax.lax.rsqrt(var + 1e-5) * g + b

    # -------------------- Attention (pre-norm) + residual -----------------
    h = layer_norm(x, ln1_g_ref[0], ln1_b_ref[0])    # (N, D) f32

    # Fused QKV: one lane-dense matmul, bf16 operands, f32 accumulation.
    qkv = jnp.dot(h.astype(jnp.bfloat16), w_qkv_ref[0],
                  preferred_element_type=jnp.float32)          # (N, 3*inner)
    qkv_b = qkv.astype(jnp.bfloat16)

    ctx_heads = []
    for hh in range(heads):                          # static unroll (small H)
        lo = hh * dim_head
        q = qkv_b[:, lo:lo + dim_head]                          # (N, dh)
        k = qkv_b[:, inner + lo:inner + lo + dim_head]
        v = qkv_b[:, 2 * inner + lo:2 * inner + lo + dim_head]

        s = jnp.dot(q, k.T, preferred_element_type=jnp.float32) * scale  # (N, N)
        s = s - jnp.max(s, axis=-1, keepdims=True)              # stable softmax
        e = jnp.exp(s)
        p = e * pl.reciprocal(jnp.sum(e, axis=-1, keepdims=True), approx=True)
        # TODO(synk): attention dropout is identity (eval mode).
        ctx_heads.append(jnp.dot(p.astype(jnp.bfloat16), v,
                                 preferred_element_type=jnp.float32))    # (N, dh)

    ctx = jnp.concatenate(ctx_heads, axis=-1)        # (N, inner) == concat(heads)
    attn_out = jnp.dot(ctx.astype(jnp.bfloat16), w_o_ref[0],
                       preferred_element_type=jnp.float32) + b_o_ref[0]
    # TODO(synk): output-projection dropout is identity (eval mode).
    x = x + attn_out                                 # residual

    # -------------------- FeedForward (pre-norm) + residual ---------------
    h = layer_norm(x, ln2_g_ref[0], ln2_b_ref[0])
    h = jnp.dot(h.astype(jnp.bfloat16), w1_ref[0],
                preferred_element_type=jnp.float32) + b1_ref[0]
    # TODO(synk): PyTorch nn.GELU default is the exact erf form; the tanh
    #             approximation is used for robust Mosaic lowering.
    h = jax.nn.gelu(h, approximate=True)
    h = jnp.dot(h.astype(jnp.bfloat16), w2_ref[0],
                preferred_element_type=jnp.float32) + b2_ref[0]
    # TODO(synk): MLP dropout is identity (eval mode).
    x = x + h                                        # residual

    o_ref[0] = x


# ---------------------------------------------------------------------------
# Wrapper: one pallas_call for the whole network, grid = (batch, depth)
# ---------------------------------------------------------------------------
def transformer_forward(x, params, *, heads, dim_head):
    B, N, D = x.shape
    depth = params["w_qkv"].shape[0]

    weight_order = ["ln1_g", "ln1_b", "w_qkv", "w_o", "b_o",
                    "ln2_g", "ln2_b", "w1", "b1", "w2", "b2"]
    weights = [params[name] for name in weight_order]

    def weight_spec(a):
        rest = tuple(a.shape[1:])
        # One layer's slab per grid step (streamed / prefetched by the pipeline).
        return pl.BlockSpec((1,) + rest,
                            lambda b, l, _n=len(rest): (l,) + (0,) * _n)

    # Activation block: one batch element; constant across the depth axis so it
    # stays resident in VMEM for the whole depth loop.
    act_spec = pl.BlockSpec((1, N, D), lambda b, l: (b, 0, 0))

    kernel = functools.partial(_transformer_kernel, heads=heads, dim_head=dim_head)

    out = pl.pallas_call(
        kernel,
        out_shape=jax.ShapeDtypeStruct((B, N, D), jnp.float32),
        grid_spec=pltpu.PrefetchScalarGridSpec(
            num_scalar_prefetch=0,
            grid=(B, depth),
            in_specs=[act_spec] + [weight_spec(a) for a in weights],
            out_specs=act_spec,
        ),
        compiler_params=pltpu.CompilerParams(
            # batch is independent (split across TensorCores on v7x),
            # depth is a sequential reduction over the resident activation.
            dimension_semantics=("parallel", "arbitrary"),
            vmem_limit_bytes=48 * 1024 * 1024),
    )(x, *weights)
    return out


# ---------------------------------------------------------------------------
# Deterministic synthetic parameters (lane-dense packed layouts)
# ---------------------------------------------------------------------------
def make_params(key, *, dim, depth, heads, dim_head, mlp_dim,
                w_dtype=jnp.bfloat16):
    inner = heads * dim_head
    ks = jax.random.split(key, 6)

    def w(k, shape, s=0.1):
        return (s * jax.random.normal(k, shape, jnp.float32)).astype(w_dtype)

    return {
        # Attention (to_qkv packed as [Q | K | V] along the lane dim, each of
        # width heads*dim_head with heads concatenated — matches chunk(3) +
        # rearrange('b n (h d) -> b h n d') of the PyTorch module).
        "ln1_g": jnp.ones((depth, 1, dim), jnp.float32),
        "ln1_b": jnp.zeros((depth, 1, dim), jnp.float32),
        "w_qkv": w(ks[0], (depth, dim, 3 * inner)),
        "w_o":   w(ks[1], (depth, inner, dim)),
        "b_o":   jnp.zeros((depth, 1, dim), jnp.float32),
        # FeedForward
        "ln2_g": jnp.ones((depth, 1, dim), jnp.float32),
        "ln2_b": jnp.zeros((depth, 1, dim), jnp.float32),
        "w1":    w(ks[2], (depth, dim, mlp_dim)),
        "b1":    0.02 * jax.random.normal(ks[3], (depth, 1, mlp_dim), jnp.float32),
        "w2":    w(ks[4], (depth, mlp_dim, dim)),
        "b2":    0.02 * jax.random.normal(ks[5], (depth, 1, dim), jnp.float32),
    }


# ---------------------------------------------------------------------------
if __name__ == "__main__":
    key = jax.random.PRNGKey(0)
    pkey, xkey = jax.random.split(key)

    B, N = 2, 16                             # batch, sequence length
    DIM, DEPTH, HEADS, DIM_HEAD, MLP = 64, 2, 4, 16, 128

    params = make_params(pkey, dim=DIM, depth=DEPTH, heads=HEADS,
                         dim_head=DIM_HEAD, mlp_dim=MLP)
    x = jax.random.normal(xkey, (B, N, DIM), jnp.float32)

    fwd = jax.jit(functools.partial(transformer_forward,
                                    heads=HEADS, dim_head=DIM_HEAD))
    out = jax.block_until_ready(fwd(x, params))

    assert out.shape == (B, N, DIM), out.shape
    assert bool(jnp.all(jnp.isfinite(out)))
    print("KERNEL_OK")
</pallas_src>

<mosaic_0001>
module attributes {stable_mosaic.version = 11 : i64} {
  func.func @_transformer_kernel(%arg0: i32, %arg1: i32, %arg2: memref<1x16x64xf32, #tpu.memory_space<vmem>>, %arg3: memref<1x1x64xf32, #tpu.memory_space<vmem>>, %arg4: memref<1x1x64xf32, #tpu.memory_space<vmem>>, %arg5: memref<1x64x192xbf16, #tpu.memory_space<vmem>>, %arg6: memref<1x64x64xbf16, #tpu.memory_space<vmem>>, %arg7: memref<1x1x64xf32, #tpu.memory_space<vmem>>, %arg8: memref<1x1x64xf32, #tpu.memory_space<vmem>>, %arg9: memref<1x1x64xf32, #tpu.memory_space<vmem>>, %arg10: memref<1x64x128xbf16, #tpu.memory_space<vmem>>, %arg11: memref<1x1x128xf32, #tpu.memory_space<vmem>>, %arg12: memref<1x128x64xbf16, #tpu.memory_space<vmem>>, %arg13: memref<1x1x64xf32, #tpu.memory_space<vmem>>, %arg14: memref<1x16x64xf32, #tpu.memory_space<vmem>>) attributes {dimension_semantics = [#tpu.dimension_semantics<parallel>, #tpu.dimension_semantics<arbitrary>], iteration_bounds = array<i64: 2, 2>, scalar_prefetch = 0 : i64, scratch_operands = 0 : i64, tpu.core_type = #tpu.core_type<tc>, window_params = [{transform_indices = @transform_0, window_bounds = array<i64: 1, 16, 64>}, {transform_indices = @transform_1, window_bounds = array<i64: 1, 1, 64>}, {transform_indices = @transform_2, window_bounds = array<i64: 1, 1, 64>}, {transform_indices = @transform_3, window_bounds = array<i64: 1, 64, 192>}, {transform_indices = @transform_4, window_bounds = array<i64: 1, 64, 64>}, {transform_indices = @transform_5, window_bounds = array<i64: 1, 1, 64>}, {transform_indices = @transform_6, window_bounds = array<i64: 1, 1, 64>}, {transform_indices = @transform_7, window_bounds = array<i64: 1, 1, 64>}, {transform_indices = @transform_8, window_bounds = array<i64: 1, 64, 128>}, {transform_indices = @transform_9, window_bounds = array<i64: 1, 1, 128>}, {transform_indices = @transform_10, window_bounds = array<i64: 1, 128, 64>}, {transform_indices = @transform_11, window_bounds = array<i64: 1, 1, 64>}, {transform_indices = @transform_12, window_bounds = array<i64: 1, 16, 64>}]} {
    %c0_i32 = arith.constant 0 : i32
    %0 = arith.cmpi eq, %arg1, %c0_i32 : i32
    %1 = arith.extui %0 : i1 to i32
    %c0_i32_0 = arith.constant 0 : i32
    %2 = arith.cmpi ne, %1, %c0_i32_0 : i32
    scf.if %2 {
      %c0_76 = arith.constant 0 : index
      %c0_77 = arith.constant 0 : index
      %c0_78 = arith.constant 0 : index
      %181 = vector.load %arg2[%c0_76, %c0_77, %c0_78] : memref<1x16x64xf32, #tpu.memory_space<vmem>>, vector<1x16x64xf32>
      %c0_79 = arith.constant 0 : index
      %c0_80 = arith.constant 0 : index
      %c0_81 = arith.constant 0 : index
      %182 = vector.load %arg14[%c0_79, %c0_80, %c0_81] : memref<1x16x64xf32, #tpu.memory_space<vmem>>, vector<1x16x64xf32>
      tpu.vector_store %arg14[%c0_79, %c0_80, %c0_81], %181 {strides = array<i32>} : memref<1x16x64xf32, #tpu.memory_space<vmem>>, vector<1x16x64xf32>,
    } else {
    }
    %c0 = arith.constant 0 : index
    %c0_1 = arith.constant 0 : index
    %c0_2 = arith.constant 0 : index
    %3 = vector.load %arg14[%c0, %c0_1, %c0_2] : memref<1x16x64xf32, #tpu.memory_space<vmem>>, vector<1x16x64xf32>
    %4 = vector.shape_cast %3 : vector<1x16x64xf32> to vector<16x64xf32>
    %c0_3 = arith.constant 0 : index
    %c0_4 = arith.constant 0 : index
    %c0_5 = arith.constant 0 : index
    %5 = vector.load %arg3[%c0_3, %c0_4, %c0_5] : memref<1x1x64xf32, #tpu.memory_space<vmem>>, vector<1x1x64xf32>
    %6 = vector.shape_cast %5 : vector<1x1x64xf32> to vector<1x64xf32>
    %c0_6 = arith.constant 0 : index
    %c0_7 = arith.constant 0 : index
    %c0_8 = arith.constant 0 : index
    %7 = vector.load %arg4[%c0_6, %c0_7, %c0_8] : memref<1x1x64xf32, #tpu.memory_space<vmem>>, vector<1x1x64xf32>
    %8 = vector.shape_cast %7 : vector<1x1x64xf32> to vector<1x64xf32>
    %cst = arith.constant dense<0.000000e+00> : vector<16xf32>
    %9 = vector.multi_reduction <add>, %4, %cst [1] : vector<16x64xf32> to vector<16xf32>
    %10 = vector.shape_cast %9 : vector<16xf32> to vector<16x1xf32>
    %cst_9 = arith.constant 6.400000e+01 : f32
    %11 = vector.broadcast %cst_9 : f32 to vector<16x1xf32>
    %12 = arith.divf %10, %11 : vector<16x1xf32>
    %13 = vector.broadcast %12 : vector<16x1xf32> to vector<16x64xf32>
    %14 = arith.subf %4, %13 : vector<16x64xf32>
    %15 = arith.mulf %14, %14 : vector<16x64xf32>
    %cst_10 = arith.constant dense<0.000000e+00> : vector<16xf32>
    %16 = vector.multi_reduction <add>, %15, %cst_10 [1] : vector<16x64xf32> to vector<16xf32>
    %17 = vector.shape_cast %16 : vector<16xf32> to vector<16x1xf32>
    %cst_11 = arith.constant 6.400000e+01 : f32
    %18 = vector.broadcast %cst_11 : f32 to vector<16x1xf32>
    %19 = arith.divf %17, %18 : vector<16x1xf32>
    %20 = vector.broadcast %12 : vector<16x1xf32> to vector<16x64xf32>
    %21 = arith.subf %4, %20 : vector<16x64xf32>
    %cst_12 = arith.constant 9.99999974E-6 : f32
    %22 = vector.broadcast %cst_12 : f32 to vector<16x1xf32>
    %23 = arith.addf %19, %22 : vector<16x1xf32>
    %24 = math.rsqrt %23 : vector<16x1xf32>
    %25 = vector.broadcast %24 : vector<16x1xf32> to vector<16x64xf32>
    %26 = arith.mulf %21, %25 : vector<16x64xf32>
    %27 = vector.broadcast %6 : vector<1x64xf32> to vector<16x64xf32>
    %28 = arith.mulf %26, %27 : vector<16x64xf32>
    %29 = vector.broadcast %8 : vector<1x64xf32> to vector<16x64xf32>
    %30 = arith.addf %28, %29 : vector<16x64xf32>
    %31 = arith.truncf %30 : vector<16x64xf32> to vector<16x64xbf16>
    %c0_13 = arith.constant 0 : index
    %c0_14 = arith.constant 0 : index
    %c0_15 = arith.constant 0 : index
    %32 = vector.load %arg5[%c0_13, %c0_14, %c0_15] : memref<1x64x192xbf16, #tpu.memory_space<vmem>>, vector<1x64x192xbf16>
    %33 = vector.shape_cast %32 : vector<1x64x192xbf16> to vector<64x192xbf16>
    %cst_16 = arith.constant dense<0.000000e+00> : vector<16x192xf32>
    %34 = tpu.matmul %31, %33, %cst_16 {dimension_numbers = #tpu.dot_dimension_numbers<[1], [0], [0], [1], [0, 0, 1, 1], [], []>} : vector<16x64xbf16>, vector<64x192xbf16>, vector<16x192xf32> -> vector<16x192xf32>
    %35 = arith.truncf %34 : vector<16x192xf32> to vector<16x192xbf16>
    %36 = vector.extract_strided_slice %35 {offsets = [0, 0], sizes = [16, 16], strides = [1, 1]} : vector<16x192xbf16> to vector<16x16xbf16>
    %37 = vector.extract_strided_slice %35 {offsets = [0, 64], sizes = [16, 16], strides = [1, 1]} : vector<16x192xbf16> to vector<16x16xbf16>
    %38 = vector.extract_strided_slice %35 {offsets = [0, 128], sizes = [16, 16], strides = [1, 1]} : vector<16x192xbf16> to vector<16x16xbf16>
    %39 = tpu.transpose %37, [1, 0] : vector<16x16xbf16> -> vector<16x16xbf16>
    %cst_17 = arith.constant dense<0.000000e+00> : vector<16x16xf32>
    %40 = tpu.matmul %36, %39, %cst_17 {dimension_numbers = #tpu.dot_dimension_numbers<[1], [0], [0], [1], [0, 0, 1, 1], [], []>} : vector<16x16xbf16>, vector<16x16xbf16>, vector<16x16xf32> -> vector<16x16xf32>
    %cst_18 = arith.constant 2.500000e-01 : f32
    %41 = vector.broadcast %cst_18 : f32 to vector<16x16xf32>
    %42 = arith.mulf %40, %41 : vector<16x16xf32>
    %cst_19 = arith.constant dense<0xFF800000> : vector<16xf32>
    %43 = vector.multi_reduction <maximumf>, %42, %cst_19 [1] : vector<16x16xf32> to vector<16xf32>
    %44 = vector.shape_cast %43 : vector<16xf32> to vector<16x1xf32>
    %45 = vector.broadcast %44 : vector<16x1xf32> to vector<16x16xf32>
    %46 = arith.subf %42, %45 : vector<16x16xf32>
    %47 = math.exp %46 : vector<16x16xf32>
    %cst_20 = arith.constant dense<0.000000e+00> : vector<16xf32>
    %48 = vector.multi_reduction <add>, %47, %cst_20 [1] : vector<16x16xf32> to vector<16xf32>
    %49 = vector.shape_cast %48 : vector<16xf32> to vector<16x1xf32>
    %50 = tpu.reciprocal %49 {approx = true} : vector<16x1xf32> -> vector<16x1xf32>
    %51 = vector.broadcast %50 : vector<16x1xf32> to vector<16x16xf32>
    %52 = arith.mulf %47, %51 : vector<16x16xf32>
    %53 = arith.truncf %52 : vector<16x16xf32> to vector<16x16xbf16>
    %cst_21 = arith.constant dense<0.000000e+00> : vector<16x16xf32>
    %54 = tpu.matmul %53, %38, %cst_21 {dimension_numbers = #tpu.dot_dimension_numbers<[1], [0], [0], [1], [0, 0, 1, 1], [], []>} : vector<16x16xbf16>, vector<16x16xbf16>, vector<16x16xf32> -> vector<16x16xf32>
    %55 = vector.extract_strided_slice %35 {offsets = [0, 16], sizes = [16, 16], strides = [1, 1]} : vector<16x192xbf16> to vector<16x16xbf16>
    %56 = vector.extract_strided_slice %35 {offsets = [0, 80], sizes = [16, 16], strides = [1, 1]} : vector<16x192xbf16> to vector<16x16xbf16>
    %57 = vector.extract_strided_slice %35 {offsets = [0, 144], sizes = [16, 16], strides = [1, 1]} : vector<16x192xbf16> to vector<16x16xbf16>
    %58 = tpu.transpose %56, [1, 0] : vector<16x16xbf16> -> vector<16x16xbf16>
    %cst_22 = arith.constant dense<0.000000e+00> : vector<16x16xf32>
    %59 = tpu.matmul %55, %58, %cst_22 {dimension_numbers = #tpu.dot_dimension_numbers<[1], [0], [0], [1], [0, 0, 1, 1], [], []>} : vector<16x16xbf16>, vector<16x16xbf16>, vector<16x16xf32> -> vector<16x16xf32>
    %cst_23 = arith.constant 2.500000e-01 : f32
    %60 = vector.broadcast %cst_23 : f32 to vector<16x16xf32>
    %61 = arith.mulf %59, %60 : vector<16x16xf32>
    %cst_24 = arith.constant dense<0xFF800000> : vector<16xf32>
    %62 = vector.multi_reduction <maximumf>, %61, %cst_24 [1] : vector<16x16xf32> to vector<16xf32>
    %63 = vector.shape_cast %62 : vector<16xf32> to vector<16x1xf32>
    %64 = vector.broadcast %63 : vector<16x1xf32> to vector<16x16xf32>
    %65 = arith.subf %61, %64 : vector<16x16xf32>
    %66 = math.exp %65 : vector<16x16xf32>
    %cst_25 = arith.constant dense<0.000000e+00> : vector<16xf32>
    %67 = vector.multi_reduction <add>, %66, %cst_25 [1] : vector<16x16xf32> to vector<16xf32>
    %68 = vector.shape_cast %67 : vector<16xf32> to vector<16x1xf32>
    %69 = tpu.reciprocal %68 {approx = true} : vector<16x1xf32> -> vector<16x1xf32>
    %70 = vector.broadcast %69 : vector<16x1xf32> to vector<16x16xf32>
    %71 = arith.mulf %66, %70 : vector<16x16xf32>
    %72 = arith.truncf %71 : vector<16x16xf32> to vector<16x16xbf16>
    %cst_26 = arith.constant dense<0.000000e+00> : vector<16x16xf32>
    %73 = tpu.matmul %72, %57, %cst_26 {dimension_numbers = #tpu.dot_dimension_numbers<[1], [0], [0], [1], [0, 0, 1, 1], [], []>} : vector<16x16xbf16>, vector<16x16xbf16>, vector<16x16xf32> -> vector<16x16xf32>
    %74 = vector.extract_strided_slice %35 {offsets = [0, 32], sizes = [16, 16], strides = [1, 1]} : vector<16x192xbf16> to vector<16x16xbf16>
    %75 = vector.extract_strided_slice %35 {offsets = [0, 96], sizes = [16, 16], strides = [1, 1]} : vector<16x192xbf16> to vector<16x16xbf16>
    %76 = vector.extract_strided_slice %35 {offsets = [0, 160], sizes = [16, 16], strides = [1, 1]} : vector<16x192xbf16> to vector<16x16xbf16>
    %77 = tpu.transpose %75, [1, 0] : vector<16x16xbf16> -> vector<16x16xbf16>
    %cst_27 = arith.constant dense<0.000000e+00> : vector<16x16xf32>
    %78 = tpu.matmul %74, %77, %cst_27 {dimension_numbers = #tpu.dot_dimension_numbers<[1], [0], [0], [1], [0, 0, 1, 1], [], []>} : vector<16x16xbf16>, vector<16x16xbf16>, vector<16x16xf32> -> vector<16x16xf32>
    %cst_28 = arith.constant 2.500000e-01 : f32
    %79 = vector.broadcast %cst_28 : f32 to vector<16x16xf32>
    %80 = arith.mulf %78, %79 : vector<16x16xf32>
    %cst_29 = arith.constant dense<0xFF800000> : vector<16xf32>
    %81 = vector.multi_reduction <maximumf>, %80, %cst_29 [1] : vector<16x16xf32> to vector<16xf32>
    %82 = vector.shape_cast %81 : vector<16xf32> to vector<16x1xf32>
    %83 = vector.broadcast %82 : vector<16x1xf32> to vector<16x16xf32>
    %84 = arith.subf %80, %83 : vector<16x16xf32>
    %85 = math.exp %84 : vector<16x16xf32>
    %cst_30 = arith.constant dense<0.000000e+00> : vector<16xf32>
    %86 = vector.multi_reduction <add>, %85, %cst_30 [1] : vector<16x16xf32> to vector<16xf32>
    %87 = vector.shape_cast %86 : vector<16xf32> to vector<16x1xf32>
    %88 = tpu.reciprocal %87 {approx = true} : vector<16x1xf32> -> vector<16x1xf32>
    %89 = vector.broadcast %88 : vector<16x1xf32> to vector<16x16xf32>
    %90 = arith.mulf %85, %89 : vector<16x16xf32>
    %91 = arith.truncf %90 : vector<16x16xf32> to vector<16x16xbf16>
    %cst_31 = arith.constant dense<0.000000e+00> : vector<16x16xf32>
    %92 = tpu.matmul %91, %76, %cst_31 {dimension_numbers = #tpu.dot_dimension_numbers<[1], [0], [0], [1], [0, 0, 1, 1], [], []>} : vector<16x16xbf16>, vector<16x16xbf16>, vector<16x16xf32> -> vector<16x16xf32>
    %93 = vector.extract_strided_slice %35 {offsets = [0, 48], sizes = [16, 16], strides = [1, 1]} : vector<16x192xbf16> to vector<16x16xbf16>
    %94 = vector.extract_strided_slice %35 {offsets = [0, 112], sizes = [16, 16], strides = [1, 1]} : vector<16x192xbf16> to vector<16x16xbf16>
    %95 = vector.extract_strided_slice %35 {offsets = [0, 176], sizes = [16, 16], strides = [1, 1]} : vector<16x192xbf16> to vector<16x16xbf16>
    %96 = tpu.transpose %94, [1, 0] : vector<16x16xbf16> -> vector<16x16xbf16>
    %cst_32 = arith.constant dense<0.000000e+00> : vector<16x16xf32>
    %97 = tpu.matmul %93, %96, %cst_32 {dimension_numbers = #tpu.dot_dimension_numbers<[1], [0], [0], [1], [0, 0, 1, 1], [], []>} : vector<16x16xbf16>, vector<16x16xbf16>, vector<16x16xf32> -> vector<16x16xf32>
    %cst_33 = arith.constant 2.500000e-01 : f32
    %98 = vector.broadcast %cst_33 : f32 to vector<16x16xf32>
    %99 = arith.mulf %97, %98 : vector<16x16xf32>
    %cst_34 = arith.constant dense<0xFF800000> : vector<16xf32>
    %100 = vector.multi_reduction <maximumf>, %99, %cst_34 [1] : vector<16x16xf32> to vector<16xf32>
    %101 = vector.shape_cast %100 : vector<16xf32> to vector<16x1xf32>
    %102 = vector.broadcast %101 : vector<16x1xf32> to vector<16x16xf32>
    %103 = arith.subf %99, %102 : vector<16x16xf32>
    %104 = math.exp %103 : vector<16x16xf32>
    %cst_35 = arith.constant dense<0.000000e+00> : vector<16xf32>
    %105 = vector.multi_reduction <add>, %104, %cst_35 [1] : vector<16x16xf32> to vector<16xf32>
    %106 = vector.shape_cast %105 : vector<16xf32> to vector<16x1xf32>
    %107 = tpu.reciprocal %106 {approx = true} : vector<16x1xf32> -> vector<16x1xf32>
    %108 = vector.broadcast %107 : vector<16x1xf32> to vector<16x16xf32>
    %109 = arith.mulf %104, %108 : vector<16x16xf32>
    %110 = arith.truncf %109 : vector<16x16xf32> to vector<16x16xbf16>
    %cst_36 = arith.constant dense<0.000000e+00> : vector<16x16xf32>
    %111 = tpu.matmul %110, %95, %cst_36 {dimension_numbers = #tpu.dot_dimension_numbers<[1], [0], [0], [1], [0, 0, 1, 1], [], []>} : vector<16x16xbf16>, vector<16x16xbf16>, vector<16x16xf32> -> vector<16x16xf32>
    %112 = tpu.concatenate %54, %73, %92, %111 in 1 : vector<16x16xf32>, vector<16x16xf32>, vector<16x16xf32>, vector<16x16xf32> -> vector<16x64xf32>
    %113 = arith.truncf %112 : vector<16x64xf32> to vector<16x64xbf16>
    %c0_37 = arith.constant 0 : index
    %c0_38 = arith.constant 0 : index
    %c0_39 = arith.constant 0 : index
    %114 = vector.load %arg6[%c0_37, %c0_38, %c0_39] : memref<1x64x64xbf16, #tpu.memory_space<vmem>>, vector<1x64x64xbf16>
    %115 = vector.shape_cast %114 : vector<1x64x64xbf16> to vector<64x64xbf16>
    %cst_40 = arith.constant dense<0.000000e+00> : vector<16x64xf32>
    %116 = tpu.matmul %113, %115, %cst_40 {dimension_numbers = #tpu.dot_dimension_numbers<[1], [0], [0], [1], [0, 0, 1, 1], [], []>} : vector<16x64xbf16>, vector<64x64xbf16>, vector<16x64xf32> -> vector<16x64xf32>
    %c0_41 = arith.constant 0 : index
    %c0_42 = arith.constant 0 : index
    %c0_43 = arith.constant 0 : index
    %117 = vector.load %arg7[%c0_41, %c0_42, %c0_43] : memref<1x1x64xf32, #tpu.memory_space<vmem>>, vector<1x1x64xf32>
    %118 = vector.shape_cast %117 : vector<1x1x64xf32> to vector<1x64xf32>
    %119 = vector.broadcast %118 : vector<1x64xf32> to vector<16x64xf32>
    %120 = arith.addf %116, %119 : vector<16x64xf32>
    %121 = arith.addf %4, %120 : vector<16x64xf32>
    %c0_44 = arith.constant 0 : index
    %c0_45 = arith.constant 0 : index
    %c0_46 = arith.constant 0 : index
    %122 = vector.load %arg8[%c0_44, %c0_45, %c0_46] : memref<1x1x64xf32, #tpu.memory_space<vmem>>, vector<1x1x64xf32>
    %123 = vector.shape_cast %122 : vector<1x1x64xf32> to vector<1x64xf32>
    %c0_47 = arith.constant 0 : index
    %c0_48 = arith.constant 0 : index
    %c0_49 = arith.constant 0 : index
    %124 = vector.load %arg9[%c0_47, %c0_48, %c0_49] : memref<1x1x64xf32, #tpu.memory_space<vmem>>, vector<1x1x64xf32>
    %125 = vector.shape_cast %124 : vector<1x1x64xf32> to vector<1x64xf32>
    %cst_50 = arith.constant dense<0.000000e+00> : vector<16xf32>
    %126 = vector.multi_reduction <add>, %121, %cst_50 [1] : vector<16x64xf32> to vector<16xf32>
    %127 = vector.shape_cast %126 : vector<16xf32> to vector<16x1xf32>
    %cst_51 = arith.constant 6.400000e+01 : f32
    %128 = vector.broadcast %cst_51 : f32 to vector<16x1xf32>
    %129 = arith.divf %127, %128 : vector<16x1xf32>
    %130 = vector.broadcast %129 : vector<16x1xf32> to vector<16x64xf32>
    %131 = arith.subf %121, %130 : vector<16x64xf32>
    %132 = arith.mulf %131, %131 : vector<16x64xf32>
    %cst_52 = arith.constant dense<0.000000e+00> : vector<16xf32>
    %133 = vector.multi_reduction <add>, %132, %cst_52 [1] : vector<16x64xf32> to vector<16xf32>
    %134 = vector.shape_cast %133 : vector<16xf32> to vector<16x1xf32>
    %cst_53 = arith.constant 6.400000e+01 : f32
    %135 = vector.broadcast %cst_53 : f32 to vector<16x1xf32>
    %136 = arith.divf %134, %135 : vector<16x1xf32>
    %137 = vector.broadcast %129 : vector<16x1xf32> to vector<16x64xf32>
    %138 = arith.subf %121, %137 : vector<16x64xf32>
    %cst_54 = arith.constant 9.99999974E-6 : f32
    %139 = vector.broadcast %cst_54 : f32 to vector<16x1xf32>
    %140 = arith.addf %136, %139 : vector<16x1xf32>
    %141 = math.rsqrt %140 : vector<16x1xf32>
    %142 = vector.broadcast %141 : vector<16x1xf32> to vector<16x64xf32>
    %143 = arith.mulf %138, %142 : vector<16x64xf32>
    %144 = vector.broadcast %123 : vector<1x64xf32> to vector<16x64xf32>
    %145 = arith.mulf %143, %144 : vector<16x64xf32>
    %146 = vector.broadcast %125 : vector<1x64xf32> to vector<16x64xf32>
    %147 = arith.addf %145, %146 : vector<16x64xf32>
    %148 = arith.truncf %147 : vector<16x64xf32> to vector<16x64xbf16>
    %c0_55 = arith.constant 0 : index
    %c0_56 = arith.constant 0 : index
    %c0_57 = arith.constant 0 : index
    %149 = vector.load %arg10[%c0_55, %c0_56, %c0_57] : memref<1x64x128xbf16, #tpu.memory_space<vmem>>, vector<1x64x128xbf16>
    %150 = vector.shape_cast %149 : vector<1x64x128xbf16> to vector<64x128xbf16>
    %cst_58 = arith.constant dense<0.000000e+00> : vector<16x128xf32>
    %151 = tpu.matmul %148, %150, %cst_58 {dimension_numbers = #tpu.dot_dimension_numbers<[1], [0], [0], [1], [0, 0, 1, 1], [], []>} : vector<16x64xbf16>, vector<64x128xbf16>, vector<16x128xf32> -> vector<16x128xf32>
    %c0_59 = arith.constant 0 : index
    %c0_60 = arith.constant 0 : index
    %c0_61 = arith.constant 0 : index
    %152 = vector.load %arg11[%c0_59, %c0_60, %c0_61] : memref<1x1x128xf32, #tpu.memory_space<vmem>>, vector<1x1x128xf32>
    %153 = vector.shape_cast %152 : vector<1x1x128xf32> to vector<1x128xf32>
    %154 = vector.broadcast %153 : vector<1x128xf32> to vector<16x128xf32>
    %155 = arith.addf %151, %154 : vector<16x128xf32>
    %156 = arith.mulf %155, %155 : vector<16x128xf32>
    %157 = arith.mulf %155, %156 : vector<16x128xf32>
    %cst_62 = arith.constant 4.471500e-02 : f32
    %158 = vector.broadcast %cst_62 : f32 to vector<16x128xf32>
    %159 = arith.mulf %158, %157 : vector<16x128xf32>
    %160 = arith.addf %155, %159 : vector<16x128xf32>
    %cst_63 = arith.constant 0.797884583 : f32
    %161 = vector.broadcast %cst_63 : f32 to vector<16x128xf32>
    %162 = arith.mulf %161, %160 : vector<16x128xf32>
    %163 = math.tanh %162 : vector<16x128xf32>
    %cst_64 = arith.constant 1.000000e+00 : f32
    %164 = vector.broadcast %cst_64 : f32 to vector<16x128xf32>
    %165 = arith.addf %164, %163 : vector<16x128xf32>
    %cst_65 = arith.constant 5.000000e-01 : f32
    %166 = vector.broadcast %cst_65 : f32 to vector<16x128xf32>
    %167 = arith.mulf %166, %165 : vector<16x128xf32>
    %168 = arith.mulf %155, %167 : vector<16x128xf32>
    %169 = arith.truncf %168 : vector<16x128xf32> to vector<16x128xbf16>
    %c0_66 = arith.constant 0 : index
    %c0_67 = arith.constant 0 : index
    %c0_68 = arith.constant 0 : index
    %170 = vector.load %arg12[%c0_66, %c0_67, %c0_68] : memref<1x128x64xbf16, #tpu.memory_space<vmem>>, vector<1x128x64xbf16>
    %171 = vector.shape_cast %170 : vector<1x128x64xbf16> to vector<128x64xbf16>
    %cst_69 = arith.constant dense<0.000000e+00> : vector<16x64xf32>
    %172 = tpu.matmul %169, %171, %cst_69 {dimension_numbers = #tpu.dot_dimension_numbers<[1], [0], [0], [1], [0, 0, 1, 1], [], []>} : vector<16x128xbf16>, vector<128x64xbf16>, vector<16x64xf32> -> vector<16x64xf32>
    %c0_70 = arith.constant 0 : index
    %c0_71 = arith.constant 0 : index
    %c0_72 = arith.constant 0 : index
    %173 = vector.load %arg13[%c0_70, %c0_71, %c0_72] : memref<1x1x64xf32, #tpu.memory_space<vmem>>, vector<1x1x64xf32>
    %174 = vector.shape_cast %173 : vector<1x1x64xf32> to vector<1x64xf32>
    %175 = vector.broadcast %174 : vector<1x64xf32> to vector<16x64xf32>
    %176 = arith.addf %172, %175 : vector<16x64xf32>
    %177 = arith.addf %121, %176 : vector<16x64xf32>
    %c0_73 = arith.constant 0 : index
    %c0_74 = arith.constant 0 : index
    %c0_75 = arith.constant 0 : index
    %178 = vector.load %arg14[%c0_73, %c0_74, %c0_75] : memref<1x16x64xf32, #tpu.memory_space<vmem>>, vector<1x16x64xf32>
    %179 = vector.shape_cast %178 : vector<1x16x64xf32> to vector<16x64xf32>
    %180 = vector.shape_cast %177 : vector<16x64xf32> to vector<1x16x64xf32>
    tpu.vector_store %arg14[%c0_73, %c0_74, %c0_75], %180 {strides = array<i32>} : memref<1x16x64xf32, #tpu.memory_space<vmem>>, vector<1x16x64xf32>,
    return
  }
  func.func @transform_0(%arg0: i32, %arg1: i32) -> (i32, i32, i32) {
    %c0_i32 = arith.constant 0 : i32
    %c0_i32_0 = arith.constant 0 : i32
    %c0_i32_1 = arith.constant 0 : i32
    return %arg0, %c0_i32, %c0_i32_0 : i32, i32, i32
  }
  func.func @transform_1(%arg0: i32, %arg1: i32) -> (i32, i32, i32) {
    %c0_i32 = arith.constant 0 : i32
    %c0_i32_0 = arith.constant 0 : i32
    %c0_i32_1 = arith.constant 0 : i32
    return %arg1, %c0_i32, %c0_i32_0 : i32, i32, i32
  }
  func.func @transform_2(%arg0: i32, %arg1: i32) -> (i32, i32, i32) {
    %c0_i32 = arith.constant 0 : i32
    %c0_i32_0 = arith.constant 0 : i32
    %c0_i32_1 = arith.constant 0 : i32
    return %arg1, %c0_i32, %c0_i32_0 : i32, i32, i32
  }
  func.func @transform_3(%arg0: i32, %arg1: i32) -> (i32, i32, i32) {
    %c0_i32 = arith.constant 0 : i32
    %c0_i32_0 = arith.constant 0 : i32
    %c0_i32_1 = arith.constant 0 : i32
    return %arg1, %c0_i32, %c0_i32_0 : i32, i32, i32
  }
  func.func @transform_4(%arg0: i32, %arg1: i32) -> (i32, i32, i32) {
    %c0_i32 = arith.constant 0 : i32
    %c0_i32_0 = arith.constant 0 : i32
    %c0_i32_1 = arith.constant 0 : i32
    return %arg1, %c0_i32, %c0_i32_0 : i32, i32, i32
  }
  func.func @transform_5(%arg0: i32, %arg1: i32) -> (i32, i32, i32) {
    %c0_i32 = arith.constant 0 : i32
    %c0_i32_0 = arith.constant 0 : i32
    %c0_i32_1 = arith.constant 0 : i32
    return %arg1, %c0_i32, %c0_i32_0 : i32, i32, i32
  }
  func.func @transform_6(%arg0: i32, %arg1: i32) -> (i32, i32, i32) {
    %c0_i32 = arith.constant 0 : i32
    %c0_i32_0 = arith.constant 0 : i32
    %c0_i32_1 = arith.constant 0 : i32
    return %arg1, %c0_i32, %c0_i32_0 : i32, i32, i32
  }
  func.func @transform_7(%arg0: i32, %arg1: i32) -> (i32, i32, i32) {
    %c0_i32 = arith.constant 0 : i32
    %c0_i32_0 = arith.constant 0 : i32
    %c0_i32_1 = arith.constant 0 : i32
    return %arg1, %c0_i32, %c0_i32_0 : i32, i32, i32
  }
  func.func @transform_8(%arg0: i32, %arg1: i32) -> (i32, i32, i32) {
    %c0_i32 = arith.constant 0 : i32
    %c0_i32_0 = arith.constant 0 : i32
    %c0_i32_1 = arith.constant 0 : i32
    return %arg1, %c0_i32, %c0_i32_0 : i32, i32, i32
  }
  func.func @transform_9(%arg0: i32, %arg1: i32) -> (i32, i32, i32) {
    %c0_i32 = arith.constant 0 : i32
    %c0_i32_0 = arith.constant 0 : i32
    %c0_i32_1 = arith.constant 0 : i32
    return %arg1, %c0_i32, %c0_i32_0 : i32, i32, i32
  }
  func.func @transform_10(%arg0: i32, %arg1: i32) -> (i32, i32, i32) {
    %c0_i32 = arith.constant 0 : i32
    %c0_i32_0 = arith.constant 0 : i32
    %c0_i32_1 = arith.constant 0 : i32
    return %arg1, %c0_i32, %c0_i32_0 : i32, i32, i32
  }
  func.func @transform_11(%arg0: i32, %arg1: i32) -> (i32, i32, i32) {
    %c0_i32 = arith.constant 0 : i32
    %c0_i32_0 = arith.constant 0 : i32
    %c0_i32_1 = arith.constant 0 : i32
    return %arg1, %c0_i32, %c0_i32_0 : i32, i32, i32
  }
  func.func @transform_12(%arg0: i32, %arg1: i32) -> (i32, i32, i32) {
    %c0_i32 = arith.constant 0 : i32
    %c0_i32_0 = arith.constant 0 : i32
    %c0_i32_1 = arith.constant 0 : i32
    return %arg0, %c0_i32, %c0_i32_0 : i32, i32, i32
  }
}

</mosaic_0001>

<llo_original>
// kernel: transformer_forward.1
$region0: #{transformer_forward.1}
  #allocation0 [shape = 'u32[]', space=smem, size = 0x4, offset = 0x4, fixed_abs, tag = 'smem constant byte address 0x4 - core index']
  #allocation1 [shape = 'u32[144,128]{1,0:T(1,128)}', space=vmem, size = 0x12000, scoped, tag = 'internal scratch']
  %s0 = inlined_call_operand.vmem [shape: f32[2,16,64], index: 0, kind: input, shape index: {}]
  %s1 = inlined_call_operand.vmem [shape: f32[2,1,64], index: 1, kind: input, shape index: {}]
  %s2 = inlined_call_operand.vmem [shape: f32[2,1,64], index: 2, kind: input, shape index: {}]
  %s3 = inlined_call_operand.vmem [shape: bf16[2,64,192], index: 3, kind: input, shape index: {}]
  %s4 = inlined_call_operand.vmem [shape: bf16[2,64,64], index: 4, kind: input, shape index: {}]
  %s5 = inlined_call_operand.vmem [shape: f32[2,1,64], index: 5, kind: input, shape index: {}]
  %s6 = inlined_call_operand.vmem [shape: f32[2,1,64], index: 6, kind: input, shape index: {}]
  %s7 = inlined_call_operand.hbm [shape: f32[2,1,64], index: 7, kind: input, shape index: {}]
  %s8 = inlined_call_operand.hbm [shape: bf16[2,64,128], index: 8, kind: input, shape index: {}]
  %s9 = inlined_call_operand.hbm [shape: f32[2,1,128], index: 9, kind: input, shape index: {}]
  %s10 = inlined_call_operand.vmem [shape: bf16[2,128,64], index: 10, kind: input, shape index: {}]
  %s11 = inlined_call_operand.hbm [shape: f32[2,1,64], index: 11, kind: input, shape index: {}]
  %s12 = inlined_call_operand.hbm [shape: f32[2,16,64], index: 12, kind: output, shape index: {}]
  %s13 = sld [smem:[#allocation0]]
  $region101: #{transformer_forward.1} parent=0
    _
  %s15 = ssub.s32 1, %s13
  %s16 = scalar_select 0, %s15, %s13
  $region1: #{transformer_forward.1} parent=0
    #allocation2 [shape = 'u8[1024]{0}', space=vmem, size = 0x400, scoped, tag = 'input window, operand 7']
    #allocation3 [shape = 's32[2]{0}', space=sflag, size = 0x8, scoped, tag = 'scoped memory for transformer_forward.1']
    #allocation4 [shape = 's32[2]{0}', space=sflag, size = 0x8, scoped, tag = 'scoped memory for transformer_forward.1']
    #allocation5 [shape = 'u8[32768]{0}', space=vmem, size = 0x8000, scoped, tag = 'input window, operand 8']
    #allocation6 [shape = 's32[2]{0}', space=sflag, size = 0x8, scoped, tag = 'scoped memory for transformer_forward.1']
    #allocation7 [shape = 'u8[1024]{0}', space=vmem, size = 0x400, scoped, tag = 'input window, operand 9']
    #allocation8 [shape = 'u8[1024]{0}', space=vmem, size = 0x400, scoped, tag = 'input window, operand 11']
    #allocation9 [shape = 's32[2]{0}', space=sflag, size = 0x8, scoped, tag = 'scoped memory for transformer_forward.1']
    #allocation10 [shape = 'u8[16384]{0}', space=vmem, size = 0x4000, scoped, tag = 'output window, operand 0']
    %17 = vsyncpa [#allocation3], 0
    %s18 = scalar_lea.sflag [#allocation3], 1
    %19 = vsyncpa %s18, 0
    %20 = vsyncpa [#allocation6], 0
    %s21 = scalar_lea.sflag [#allocation6], 1
    %22 = vsyncpa %s21, 0
    %23 = vsyncpa [#allocation9], 0
    %s24 = scalar_lea.sflag [#allocation9], 1
    %25 = vsyncpa %s24, 0
    %26 = vsyncpa [#allocation4], 0
    %s27 = scalar_lea.sflag [#allocation4], 1
    %28 = vsyncpa %s27, 0
    loop: start=0, step=1, limit=6
    $region2: #{transformer_forward.1} parent=1 // loop_pre_header
      _
    $region3: #{transformer_forward.1} parent=1 // loop_header
      %s30 = sphi 0, %s34
      %p31 = scmp.ge.s32.totalorder %s30, 6
      %s37 = sphi 0, %s49
      %s38 = sphi 0, %s45
      %s39 = sphi 0, %s37
      %s40 = sphi 0, %s38
      %s41 = sphi 0, %s39
      %s42 = sphi 0, %s40
      %s52 = sphi 0, %s54
      %s55 = sphi 0, %s52
      %s56 = sphi 0, %s55
      %s72 = sphi 0, %s56
      %s78 = sphi 0, %s80
      %s81 = sphi 0, %s78
      %s82 = sphi 0, %s81
      %s98 = sphi 0, %s82
      %s104 = sphi 0, %s106
      %s107 = sphi 0, %s104
      %s108 = sphi 0, %s107
      %s124 = sphi 0, %s108
      %s130 = sphi 0, %s132
      %s133 = sphi 0, %s130
      %s134 = sphi 0, %s133
      %s150 = sphi 0, %s134
      %s156 = sphi 0, %s158
      %s159 = sphi 0, %s156
      %s160 = sphi 0, %s159
      %s176 = sphi 0, %s160
      %s182 = sphi 0, %s184
      %s185 = sphi 0, %s182
      %s186 = sphi 0, %s185
      %s202 = sphi 0, %s186
      %s208 = sphi 0, %s210
      %s211 = sphi 0, %s208
      %s212 = sphi 0, %s211
      %s228 = sphi 0, %s212
      %s234 = sphi 0, %s236
      %s237 = sphi 0, %s234
      %s238 = sphi 0, %s237
      %s254 = sphi 0, %s238
      %s260 = sphi 0, %s262
      %s263 = sphi 0, %s260
      %s264 = sphi 0, %s263
      %s280 = sphi 0, %s264
      %s286 = sphi 0, %s288
      %s289 = sphi 0, %s286
      %s290 = sphi 0, %s289
      %s306 = sphi 0, %s290
      %s312 = sphi 0, %s314
      %s315 = sphi 0, %s312
      %s316 = sphi 0, %s315
      %s332 = sphi 0, %s316
      %s338 = sphi 0, %s340
      %s341 = sphi 0, %s338
      %s342 = sphi 0, %s341
      %s358 = sphi 0, %s342
      %s364 = sphi 0, %s366
      %s367 = sphi 0, %s364
      %s368 = sphi 0, %s367
      %s384 = sphi 0, %s368
    $region4: #{transformer_forward.1} parent=1 // loop_header_branch
      %33 = sbr.rel (%p31) target = $region8
    $region5: #{transformer_forward.1} parent=1 // loop_body
      %s35 = ssub.s32 %s30, 1
      %s36 = ssub.s32 %s30, 2
      %s43 = sadd.s32 1, %s38
      %p44 = scmp.ge.s32.totalorder %s43, 2
      %s45 = scalar_select %p44, 0, %s43
      %s46 = sadd.s32 1, %s37
      %s47 = scalar_select %p44, %s46, %s37
      %p48 = scmp.ge.s32.totalorder %s47, 2
      %s49 = scalar_select %p48, 0, %s47
      %s50 = ssub.s32 %s37, %s49
      %p51 = scmp.eq.s32.totalorder %s50, 0
      %s53 = sadd.s32 %s52, 1
      %s54 = scalar_select %p51, %s52, %s53
      %p57 = pneg %p51
      %p58 = scmp.eq.s32.totalorder %s30, 3
      %p59 = por %p57, %p58
      %p60 = scmp.ne.s32.totalorder %s52, %s55
      %p61 = scmp.eq.s32.totalorder %s30, 0
      %p62 = por %p60, %p61
      %p63 = scmp.ne.s32.totalorder %s52, %s55
      %p64 = scmp.eq.s32.totalorder %s35, 3
      %p65 = por %p63, %p64
      %p66 = scmp.ne.s32.totalorder %s55, %s56
      %p67 = scmp.eq.s32.totalorder %s35, 0
      %p68 = por %p66, %p67
      %p69 = scmp.ne.s32.totalorder %s55, %s56
      %p70 = scmp.eq.s32.totalorder %s36, 3
      %p71 = por %p69, %p70
      %p73 = scmp.ne.s32.totalorder %s56, %s72
      %p74 = scmp.eq.s32.totalorder %s36, 0
      %p75 = por %p73, %p74
      %s76 = ssub.s32 %s38, %s45
      %p77 = scmp.eq.s32.totalorder %s76, 0
      %s79 = sadd.s32 %s78, 1
      %s80 = scalar_select %p77, %s78, %s79
      %p83 = pneg %p77
      %p84 = scmp.eq.s32.totalorder %s30, 3
      %p85 = por %p83, %p84
      %p86 = scmp.ne.s32.totalorder %s78, %s81
      %p87 = scmp.eq.s32.totalorder %s30, 0
      %p88 = por %p86, %p87
      %p89 = scmp.ne.s32.totalorder %s78, %s81
      %p90 = scmp.eq.s32.totalorder %s35, 3
      %p91 = por %p89, %p90
      %p92 = scmp.ne.s32.totalorder %s81, %s82
      %p93 = scmp.eq.s32.totalorder %s35, 0
      %p94 = por %p92, %p93
      %p95 = scmp.ne.s32.totalorder %s81, %s82
      %p96 = scmp.eq.s32.totalorder %s36, 3
      %p97 = por %p95, %p96
      %p99 = scmp.ne.s32.totalorder %s82, %s98
      %p100 = scmp.eq.s32.totalorder %s36, 0
      %p101 = por %p99, %p100
      %s102 = ssub.s32 %s38, %s45
      %p103 = scmp.eq.s32.totalorder %s102, 0
      %s105 = sadd.s32 %s104, 1
      %s106 = scalar_select %p103, %s104, %s105
      %p109 = pneg %p103
      %p110 = scmp.eq.s32.totalorder %s30, 3
      %p111 = por %p109, %p110
      %p112 = scmp.ne.s32.totalorder %s104, %s107
      %p113 = scmp.eq.s32.totalorder %s30, 0
      %p114 = por %p112, %p113
      %p115 = scmp.ne.s32.totalorder %s104, %s107
      %p116 = scmp.eq.s32.totalorder %s35, 3
      %p117 = por %p115, %p116
      %p118 = scmp.ne.s32.totalorder %s107, %s108
      %p119 = scmp.eq.s32.totalorder %s35, 0
      %p120 = por %p118, %p119
      %p121 = scmp.ne.s32.totalorder %s107, %s108
      %p122 = scmp.eq.s32.totalorder %s36, 3
      %p123 = por %p121, %p122
      %p125 = scmp.ne.s32.totalorder %s108, %s124
      %p126 = scmp.eq.s32.totalorder %s36, 0
      %p127 = por %p125, %p126
      %s128 = ssub.s32 %s38, %s45
      %p129 = scmp.eq.s32.totalorder %s128, 0
      %s131 = sadd.s32 %s130, 1
      %s132 = scalar_select %p129, %s130, %s131
      %p135 = pneg %p129
      %p136 = scmp.eq.s32.totalorder %s30, 3
      %p137 = por %p135, %p136
      %p138 = scmp.ne.s32.totalorder %s130, %s133
      %p139 = scmp.eq.s32.totalorder %s30, 0
      %p140 = por %p138, %p139
      %p141 = scmp.ne.s32.totalorder %s130, %s133
      %p142 = scmp.eq.s32.totalorder %s35, 3
      %p143 = por %p141, %p142
      %p144 = scmp.ne.s32.totalorder %s133, %s134
      %p145 = scmp.eq.s32.totalorder %s35, 0
      %p146 = por %p144, %p145
      %p147 = scmp.ne.s32.totalorder %s133, %s134
      %p148 = scmp.eq.s32.totalorder %s36, 3
      %p149 = por %p147, %p148
      %p151 = scmp.ne.s32.totalorder %s134, %s150
      %p152 = scmp.eq.s32.totalorder %s36, 0
      %p153 = por %p151, %p152
      %s154 = ssub.s32 %s38, %s45
      %p155 = scmp.eq.s32.totalorder %s154, 0
      %s157 = sadd.s32 %s156, 1
      %s158 = scalar_select %p155, %s156, %s157
      %p161 = pneg %p155
      %p162 = scmp.eq.s32.totalorder %s30, 3
      %p163 = por %p161, %p162
      %p164 = scmp.ne.s32.totalorder %s156, %s159
      %p165 = scmp.eq.s32.totalorder %s30, 0
      %p166 = por %p164, %p165
      %p167 = scmp.ne.s32.totalorder %s156, %s159
      %p168 = scmp.eq.s32.totalorder %s35, 3
      %p169 = por %p167, %p168
      %p170 = scmp.ne.s32.totalorder %s159, %s160
      %p171 = scmp.eq.s32.totalorder %s35, 0
      %p172 = por %p170, %p171
      %p173 = scmp.ne.s32.totalorder %s159, %s160
      %p174 = scmp.eq.s32.totalorder %s36, 3
      %p175 = por %p173, %p174
      %p177 = scmp.ne.s32.totalorder %s160, %s176
      %p178 = scmp.eq.s32.totalorder %s36, 0
      %p179 = por %p177, %p178
      %s180 = ssub.s32 %s38, %s45
      %p181 = scmp.eq.s32.totalorder %s180, 0
      %s183 = sadd.s32 %s182, 1
      %s184 = scalar_select %p181, %s182, %s183
      %p187 = pneg %p181
      %p188 = scmp.eq.s32.totalorder %s30, 3
      %p189 = por %p187, %p188
      %p190 = scmp.ne.s32.totalorder %s182, %s185
      %p191 = scmp.eq.s32.totalorder %s30, 0
      %p192 = por %p190, %p191
      %p193 = scmp.ne.s32.totalorder %s182, %s185
      %p194 = scmp.eq.s32.totalorder %s35, 3
      %p195 = por %p193, %p194
      %p196 = scmp.ne.s32.totalorder %s185, %s186
      %p197 = scmp.eq.s32.totalorder %s35, 0
      %p198 = por %p196, %p197
      %p199 = scmp.ne.s32.totalorder %s185, %s186
      %p200 = scmp.eq.s32.totalorder %s36, 3
      %p201 = por %p199, %p200
      %p203 = scmp.ne.s32.totalorder %s186, %s202
      %p204 = scmp.eq.s32.totalorder %s36, 0
      %p205 = por %p203, %p204
      %s206 = ssub.s32 %s38, %s45
      %p207 = scmp.eq.s32.totalorder %s206, 0
      %s209 = sadd.s32 %s208, 1
      %s210 = scalar_select %p207, %s208, %s209
      %p213 = pneg %p207
      %p214 = scmp.eq.s32.totalorder %s30, 3
      %p215 = por %p213, %p214
      %p216 = scmp.ne.s32.totalorder %s208, %s211
      %p217 = scmp.eq.s32.totalorder %s30, 0
      %p218 = por %p216, %p217
      %p219 = scmp.ne.s32.totalorder %s208, %s211
      %p220 = scmp.eq.s32.totalorder %s35, 3
      %p221 = por %p219, %p220
      %p222 = scmp.ne.s32.totalorder %s211, %s212
      %p223 = scmp.eq.s32.totalorder %s35, 0
      %p224 = por %p222, %p223
      %p225 = scmp.ne.s32.totalorder %s211, %s212
      %p226 = scmp.eq.s32.totalorder %s36, 3
      %p227 = por %p225, %p226
      %p229 = scmp.ne.s32.totalorder %s212, %s228
      %p230 = scmp.eq.s32.totalorder %s36, 0
      %p231 = por %p229, %p230
      %s232 = ssub.s32 %s38, %s45
      %p233 = scmp.eq.s32.totalorder %s232, 0
      %s235 = sadd.s32 %s234, 1
      %s236 = scalar_select %p233, %s234, %s235
      %p239 = pneg %p233
      %p240 = scmp.eq.s32.totalorder %s30, 3
      %p241 = por %p239, %p240
      %p242 = scmp.ne.s32.totalorder %s234, %s237
      %p243 = scmp.eq.s32.totalorder %s30, 0
      %p244 = por %p242, %p243
      %p245 = scmp.ne.s32.totalorder %s234, %s237
      %p246 = scmp.eq.s32.totalorder %s35, 3
      %p247 = por %p245, %p246
      %p248 = scmp.ne.s32.totalorder %s237, %s238
      %p249 = scmp.eq.s32.totalorder %s35, 0
      %p250 = por %p248, %p249
      %p251 = scmp.ne.s32.totalorder %s237, %s238
      %p252 = scmp.eq.s32.totalorder %s36, 3
      %p253 = por %p251, %p252
      %p255 = scmp.ne.s32.totalorder %s238, %s254
      %p256 = scmp.eq.s32.totalorder %s36, 0
      %p257 = por %p255, %p256
      %s258 = ssub.s32 %s38, %s45
      %p259 = scmp.eq.s32.totalorder %s258, 0
      %s261 = sadd.s32 %s260, 1
      %s262 = scalar_select %p259, %s260, %s261
      %p265 = pneg %p259
      %p266 = scmp.eq.s32.totalorder %s30, 3
      %p267 = por %p265, %p266
      %p268 = scmp.ne.s32.totalorder %s260, %s263
      %p269 = scmp.eq.s32.totalorder %s30, 0
      %p270 = por %p268, %p269
      %p271 = scmp.ne.s32.totalorder %s260, %s263
      %p272 = scmp.eq.s32.totalorder %s35, 3
      %p273 = por %p271, %p272
      %p274 = scmp.ne.s32.totalorder %s263, %s264
      %p275 = scmp.eq.s32.totalorder %s35, 0
      %p276 = por %p274, %p275
      %p277 = scmp.ne.s32.totalorder %s263, %s264
      %p278 = scmp.eq.s32.totalorder %s36, 3
      %p279 = por %p277, %p278
      %p281 = scmp.ne.s32.totalorder %s264, %s280
      %p282 = scmp.eq.s32.totalorder %s36, 0
      %p283 = por %p281, %p282
      %s284 = ssub.s32 %s38, %s45
      %p285 = scmp.eq.s32.totalorder %s284, 0
      %s287 = sadd.s32 %s286, 1
      %s288 = scalar_select %p285, %s286, %s287
      %p291 = pneg %p285
      %p292 = scmp.eq.s32.totalorder %s30, 3
      %p293 = por %p291, %p292
      %p294 = scmp.ne.s32.totalorder %s286, %s289
      %p295 = scmp.eq.s32.totalorder %s30, 0
      %p296 = por %p294, %p295
      %p297 = scmp.ne.s32.totalorder %s286, %s289
      %p298 = scmp.eq.s32.totalorder %s35, 3
      %p299 = por %p297, %p298
      %p300 = scmp.ne.s32.totalorder %s289, %s290
      %p301 = scmp.eq.s32.totalorder %s35, 0
      %p302 = por %p300, %p301
      %p303 = scmp.ne.s32.totalorder %s289, %s290
      %p304 = scmp.eq.s32.totalorder %s36, 3
      %p305 = por %p303, %p304
      %p307 = scmp.ne.s32.totalorder %s290, %s306
      %p308 = scmp.eq.s32.totalorder %s36, 0
      %p309 = por %p307, %p308
      %s310 = ssub.s32 %s38, %s45
      %p311 = scmp.eq.s32.totalorder %s310, 0
      %s313 = sadd.s32 %s312, 1
      %s314 = scalar_select %p311, %s312, %s313
      %p317 = pneg %p311
      %p318 = scmp.eq.s32.totalorder %s30, 3
      %p319 = por %p317, %p318
      %p320 = scmp.ne.s32.totalorder %s312, %s315
      %p321 = scmp.eq.s32.totalorder %s30, 0
      %p322 = por %p320, %p321
      %p323 = scmp.ne.s32.totalorder %s312, %s315
      %p324 = scmp.eq.s32.totalorder %s35, 3
      %p325 = por %p323, %p324
      %p326 = scmp.ne.s32.totalorder %s315, %s316
      %p327 = scmp.eq.s32.totalorder %s35, 0
      %p328 = por %p326, %p327
      %p329 = scmp.ne.s32.totalorder %s315, %s316
      %p330 = scmp.eq.s32.totalorder %s36, 3
      %p331 = por %p329, %p330
      %p333 = scmp.ne.s32.totalorder %s316, %s332
      %p334 = scmp.eq.s32.totalorder %s36, 0
      %p335 = por %p333, %p334
      %s336 = ssub.s32 %s38, %s45
      %p337 = scmp.eq.s32.totalorder %s336, 0
      %s339 = sadd.s32 %s338, 1
      %s340 = scalar_select %p337, %s338, %s339
      %p343 = pneg %p337
      %p344 = scmp.eq.s32.totalorder %s30, 3
      %p345 = por %p343, %p344
      %p346 = scmp.ne.s32.totalorder %s338, %s341
      %p347 = scmp.eq.s32.totalorder %s30, 0
      %p348 = por %p346, %p347
      %p349 = scmp.ne.s32.totalorder %s338, %s341
      %p350 = scmp.eq.s32.totalorder %s35, 3
      %p351 = por %p349, %p350
      %p352 = scmp.ne.s32.totalorder %s341, %s342
      %p353 = scmp.eq.s32.totalorder %s35, 0
      %p354 = por %p352, %p353
      %p355 = scmp.ne.s32.totalorder %s341, %s342
      %p356 = scmp.eq.s32.totalorder %s36, 3
      %p357 = por %p355, %p356
      %p359 = scmp.ne.s32.totalorder %s342, %s358
      %p360 = scmp.eq.s32.totalorder %s36, 0
      %p361 = por %p359, %p360
      %s362 = ssub.s32 %s37, %s49
      %p363 = scmp.eq.s32.totalorder %s362, 0
      %s365 = sadd.s32 %s364, 1
      %s366 = scalar_select %p363, %s364, %s365
      %p369 = pneg %p363
      %p370 = scmp.eq.s32.totalorder %s30, 3
      %p371 = por %p369, %p370
      %p372 = scmp.ne.s32.totalorder %s364, %s367
      %p373 = scmp.eq.s32.totalorder %s30, 0
      %p374 = por %p372, %p373
      %p375 = scmp.ne.s32.totalorder %s364, %s367
      %p376 = scmp.eq.s32.totalorder %s35, 3
      %p377 = por %p375, %p376
      %p378 = scmp.ne.s32.totalorder %s367, %s368
      %p379 = scmp.eq.s32.totalorder %s35, 0
      %p380 = por %p378, %p379
      %p381 = scmp.ne.s32.totalorder %s367, %s368
      %p382 = scmp.eq.s32.totalorder %s36, 3
      %p383 = por %p381, %p382
      %p385 = scmp.ne.s32.totalorder %s368, %s384
      %p386 = scmp.eq.s32.totalorder %s36, 0
      %p387 = por %p385, %p386
      %p388 = scmp.le.s32.totalorder 1, %s30
      %p389 = scmp.lt.s32.totalorder %s30, 5
      %p390 = pnand %p388, %p389
      %p391 = pneg %p390
      // Predicated region
      $region9: #{transformer_forward.1} parent=5 // pred_check
        _
      $region10: #{transformer_forward.1} parent=5 // pred_check_branch
        %393 = sbr.rel (%p390) target = $region12
      $region11: #{transformer_forward.1} parent=5 // pred_region
        %s394 = ssub.s32 %s30, 1
      $region12: #{transformer_forward.1} parent=5 // pred_fallthru
        _
      %p395 = scmp.lt.s32.totalorder %s30, 4
      // Predicated region
      $region13: #{transformer_forward.1} parent=5 // pred_check
        %p396 = pneg %p395
      $region14: #{transformer_forward.1} parent=5 // pred_check_branch
        %398 = sbr.rel (%p396) target = $region16
      $region15: #{transformer_forward.1} parent=5 // pred_region
        // Predicated region
        $region17: #{transformer_forward.1} parent=15 // pred_check
          %p399 = pneg %p62
        $region18: #{transformer_forward.1} parent=15 // pred_check_branch
          %401 = sbr.rel (%p399) target = $region20
        $region19: #{transformer_forward.1} parent=15 // pred_region
          %p402 = scmp.lt.s32.totalorder %s37, 1
          %s403 = scalar_select %p402, %s37, 1
          %s404 = smul.addr %s403, 2
          %s405 = smul.addr %s404, 8
          %s406 = scalar_lea.vmem %s0, %s405
        $region20: #{transformer_forward.1} parent=15 // pred_fallthru
          _
        // Predicated region
        $region21: #{transformer_forward.1} parent=15 // pred_check
          %p407 = pneg %p88
        $region22: #{transformer_forward.1} parent=15 // pred_check_branch
          %409 = sbr.rel (%p407) target = $region24
        $region23: #{transformer_forward.1} parent=15 // pred_region
          %p410 = scmp.lt.s32.totalorder %s38, 1
          %s411 = scalar_select %p410, %s38, 1
          %s412 = scalar_lea.vmem %s1, %s411
        $region24: #{transformer_forward.1} parent=15 // pred_fallthru
          _
        // Predicated region
        $region25: #{transformer_forward.1} parent=15 // pred_check
          %p413 = pneg %p114
        $region26: #{transformer_forward.1} parent=15 // pred_check_branch
          %415 = sbr.rel (%p413) target = $region28
        $region27: #{transformer_forward.1} parent=15 // pred_region
          %p416 = scmp.lt.s32.totalorder %s38, 1
          %s417 = scalar_select %p416, %s38, 1
          %s418 = scalar_lea.vmem %s2, %s417
        $region28: #{transformer_forward.1} parent=15 // pred_fallthru
          _
        // Predicated region
        $region29: #{transformer_forward.1} parent=15 // pred_check
          %p419 = pneg %p140
        $region30: #{transformer_forward.1} parent=15 // pred_check_branch
          %421 = sbr.rel (%p419) target = $region32
        $region31: #{transformer_forward.1} parent=15 // pred_region
          %p422 = scmp.lt.s32.totalorder %s38, 1
          %s423 = scalar_select %p422, %s38, 1
          %s424 = smul.addr %s423, 16
          %s425 = smul.addr %s424, 4
          %s426 = scalar_lea.vmem %s3, %s425
        $region32: #{transformer_forward.1} parent=15 // pred_fallthru
          _
        // Predicated region
        $region33: #{transformer_forward.1} parent=15 // pred_check
          %p427 = pneg %p166
        $region34: #{transformer_forward.1} parent=15 // pred_check_branch
          %429 = sbr.rel (%p427) target = $region36
        $region35: #{transformer_forward.1} parent=15 // pred_region
          %p430 = scmp.lt.s32.totalorder %s38, 1
          %s431 = scalar_select %p430, %s38, 1
          %s432 = smul.addr %s431, 8
          %s433 = smul.addr %s432, 4
          %s434 = scalar_lea.vmem %s4, %s433
        $region36: #{transformer_forward.1} parent=15 // pred_fallthru
          _
        // Predicated region
        $region37: #{transformer_forward.1} parent=15 // pred_check
          %p435 = pneg %p192
        $region38: #{transformer_forward.1} parent=15 // pred_check_branch
          %437 = sbr.rel (%p435) target = $region40
        $region39: #{transformer_forward.1} parent=15 // pred_region
          %p438 = scmp.lt.s32.totalorder %s38, 1
          %s439 = scalar_select %p438, %s38, 1
          %s440 = scalar_lea.vmem %s5, %s439
        $region40: #{transformer_forward.1} parent=15 // pred_fallthru
          _
        // Predicated region
        $region41: #{transformer_forward.1} parent=15 // pred_check
          %p441 = pneg %p218
        $region42: #{transformer_forward.1} parent=15 // pred_check_branch
          %443 = sbr.rel (%p441) target = $region44
        $region43: #{transformer_forward.1} parent=15 // pred_region
          %p444 = scmp.lt.s32.totalorder %s38, 1
          %s445 = scalar_select %p444, %s38, 1
          %s446 = scalar_lea.vmem %s6, %s445
        $region44: #{transformer_forward.1} parent=15 // pred_fallthru
          _
        // Predicated region
        $region45: #{transformer_forward.1} parent=15 // pred_check
          %p447 = pneg %p244
        $region46: #{transformer_forward.1} parent=15 // pred_check_branch
          %449 = sbr.rel (%p447) target = $region48
        $region47: #{transformer_forward.1} parent=15 // pred_region
          %s450 = sand.u32 %s234, 1
          %s451 = scalar_lea.sflag [#allocation3], %s450
          %s452 = sand.u32 %s234, 1
          %s453 = scalar_lea.vmem [#allocation2], %s452
          %s455 = ssub.s32 16, 16
          %456 = vsyncadd %s451, %s455
          %s457 = smul.addr %s38, 16
          %s458 = scalar_lea.hbm %s7, %s457
          %s460 = sshll.u32 %s453, 4
          %s461 = int_to_ptr.vmem [resolvable:$true] %s460
          %463 = dma.hbm_to_vmem [thread:$0]  %s458, 16, %s461, %s451
        $region48: #{transformer_forward.1} parent=15 // pred_fallthru
          _
        // Predicated region
        $region49: #{transformer_forward.1} parent=15 // pred_check
          %p464 = pneg %p270
        $region50: #{transformer_forward.1} parent=15 // pred_check_branch
          %466 = sbr.rel (%p464) target = $region52
        $region51: #{transformer_forward.1} parent=15 // pred_region
          %s467 = sand.u32 %s30, 1
          %s468 = scalar_lea.sflag [#allocation6], %s467
          %s469 = sand.u32 %s260, 1
          %s470 = smul.addr %s469, 32
          %s471 = scalar_lea.vmem [#allocation5], %s470
          %s473 = ssub.s32 512, 512
          %474 = vsyncadd %s468, %s473
          %s475 = smul.addr %s38, 8
          %s476 = smul.addr %s475, 64
          %s477 = scalar_lea.hbm %s8, %s476
          %s478 = sshll.u32 %s471, 4
          %s479 = int_to_ptr.vmem [resolvable:$true] %s478
          %484 = dma.hbm_to_vmem [thread:$0]  %s477, 512, %s479, %s468, 64, 64, 4
        $region52: #{transformer_forward.1} parent=15 // pred_fallthru
          _
        // Predicated region
        $region53: #{transformer_forward.1} parent=15 // pred_check
          %p485 = pneg %p296
        $region54: #{transformer_forward.1} parent=15 // pred_check_branch
          %487 = sbr.rel (%p485) target = $region56
        $region55: #{transformer_forward.1} parent=15 // pred_region
          %s488 = sand.u32 %s30, 1
          %s489 = scalar_lea.sflag [#allocation6], %s488
          %s490 = sand.u32 %s286, 1
          %s491 = scalar_lea.vmem [#allocation7], %s490
          %s493 = ssub.s32 16, 16
          %494 = vsyncadd %s489, %s493
          %s495 = smul.addr %s38, 16
          %s496 = scalar_lea.hbm %s9, %s495
          %s498 = sshll.u32 %s491, 4
          %s499 = int_to_ptr.vmem [resolvable:$true] %s498
          %501 = dma.hbm_to_vmem [thread:$0]  %s496, 16, %s499, %s489
        $region56: #{transformer_forward.1} parent=15 // pred_fallthru
          _
        // Predicated region
        $region57: #{transformer_forward.1} parent=15 // pred_check
          %p502 = pneg %p322
        $region58: #{transformer_forward.1} parent=15 // pred_check_branch
          %504 = sbr.rel (%p502) target = $region60
        $region59: #{transformer_forward.1} parent=15 // pred_region
          %p505 = scmp.lt.s32.totalorder %s38, 1
          %s506 = scalar_select %p505, %s38, 1
          %s507 = smul.addr %s506, 16
          %s508 = smul.addr %s507, 4
          %s509 = scalar_lea.vmem %s10, %s508
        $region60: #{transformer_forward.1} parent=15 // pred_fallthru
          _
        // Predicated region
        $region61: #{transformer_forward.1} parent=15 // pred_check
          %p510 = pneg %p348
        $region62: #{transformer_forward.1} parent=15 // pred_check_branch
          %512 = sbr.rel (%p510) target = $region64
        $region63: #{transformer_forward.1} parent=15 // pred_region
          %s513 = sand.u32 %s338, 1
          %s514 = scalar_lea.sflag [#allocation9], %s513
          %s515 = sand.u32 %s338, 1
          %s516 = scalar_lea.vmem [#allocation8], %s515
          %s518 = ssub.s32 16, 16
          %519 = vsyncadd %s514, %s518
          %s520 = smul.addr %s38, 16
          %s521 = scalar_lea.hbm %s11, %s520
          %s523 = sshll.u32 %s516, 4
          %s524 = int_to_ptr.vmem [resolvable:$true] %s523
          %526 = dma.hbm_to_vmem [thread:$0]  %s521, 16, %s524, %s514
        $region64: #{transformer_forward.1} parent=15 // pred_fallthru
          _
      $region16: #{transformer_forward.1} parent=5 // pred_fallthru
        _
      %p527 = scmp.le.s32.totalorder 1, %s30
      %p528 = scmp.lt.s32.totalorder %s30, 5
      %p529 = pnand %p527, %p528
      %p530 = pneg %p529
      // Predicated region
      $region65: #{transformer_forward.1} parent=5 // pred_check
        _
      $region66: #{transformer_forward.1} parent=5 // pred_check_branch
        %532 = sbr.rel (%p529) target = $region68
      $region67: #{transformer_forward.1} parent=5 // pred_region
        %s533 = ssub.s32 %s30, 1
        %s534 = sand.u32 %s237, 1
        %s535 = scalar_lea.sflag [#allocation3], %s534
        %s536 = sand.u32 %s237, 1
        %s537 = scalar_lea.vmem [#allocation2], %s536
        // Predicated region
        $region69: #{transformer_forward.1} parent=67 // pred_check
          %p538 = pneg %p250
        $region70: #{transformer_forward.1} parent=67 // pred_check_branch
          %540 = sbr.rel (%p538) target = $region72
        $region71: #{transformer_forward.1} parent=67 // pred_region
          %541 = dma.done %s535, 16
        $region72: #{transformer_forward.1} parent=67 // pred_fallthru
          _
        %s542 = sand.u32 %s35, 1
        %s543 = scalar_lea.sflag [#allocation6], %s542
        %s544 = sand.u32 %s263, 1
        %s545 = smul.addr %s544, 32
        %s546 = scalar_lea.vmem [#allocation5], %s545
        // Predicated region
        $region73: #{transformer_forward.1} parent=67 // pred_check
          %p547 = pneg %p276
        $region74: #{transformer_forward.1} parent=67 // pred_check_branch
          %549 = sbr.rel (%p547) target = $region76
        $region75: #{transformer_forward.1} parent=67 // pred_region
          %550 = dma.done %s543, 512
        $region76: #{transformer_forward.1} parent=67 // pred_fallthru
          _
        %s551 = sand.u32 %s35, 1
        %s552 = scalar_lea.sflag [#allocation6], %s551
        %s553 = sand.u32 %s289, 1
        %s554 = scalar_lea.vmem [#allocation7], %s553
        // Predicated region
        $region77: #{transformer_forward.1} parent=67 // pred_check
          %p555 = pneg %p302
        $region78: #{transformer_forward.1} parent=67 // pred_check_branch
          %557 = sbr.rel (%p555) target = $region80
        $region79: #{transformer_forward.1} parent=67 // pred_region
          %558 = dma.done %s552, 16
        $region80: #{transformer_forward.1} parent=67 // pred_fallthru
          _
        %s559 = sand.u32 %s341, 1
        %s560 = scalar_lea.sflag [#allocation9], %s559
        %s561 = sand.u32 %s341, 1
        %s562 = scalar_lea.vmem [#allocation8], %s561
        // Predicated region
        $region81: #{transformer_forward.1} parent=67 // pred_check
          %p563 = pneg %p354
        $region82: #{transformer_forward.1} parent=67 // pred_check_branch
          %565 = sbr.rel (%p563) target = $region84
        $region83: #{transformer_forward.1} parent=67 // pred_region
          %566 = dma.done %s560, 16
        $region84: #{transformer_forward.1} parent=67 // pred_fallthru
          _
        %p567 = scmp.lt.s32.totalorder %s39, 1
        %s568 = scalar_select %p567, %s39, 1
        %s569 = smul.addr %s568, 2
        %s570 = smul.addr %s569, 8
        %s571 = scalar_lea.vmem %s0, %s570
        %p572 = pneg %p68
        %p573 = pneg %p65
        %p574 = scmp.lt.s32.totalorder %s40, 1
        %s575 = scalar_select %p574, %s40, 1
        %s576 = scalar_lea.vmem %s1, %s575
        %p577 = pneg %p94
        %p578 = pneg %p91
        %p579 = scmp.lt.s32.totalorder %s40, 1
        %s580 = scalar_select %p579, %s40, 1
        %s581 = scalar_lea.vmem %s2, %s580
        %p582 = pneg %p120
        %p583 = pneg %p117
        %p584 = scmp.lt.s32.totalorder %s40, 1
        %s585 = scalar_select %p584, %s40, 1
        %s586 = smul.addr %s585, 16
        %s587 = smul.addr %s586, 4
        %s588 = scalar_lea.vmem %s3, %s587
        %p589 = pneg %p146
        %p590 = pneg %p143
        %p591 = scmp.lt.s32.totalorder %s40, 1
        %s592 = scalar_select %p591, %s40, 1
        %s593 = smul.addr %s592, 8
        %s594 = smul.addr %s593, 4
        %s595 = scalar_lea.vmem %s4, %s594
        %p596 = pneg %p172
        %p597 = pneg %p169
        %p598 = scmp.lt.s32.totalorder %s40, 1
        %s599 = scalar_select %p598, %s40, 1
        %s600 = scalar_lea.vmem %s5, %s599
        %p601 = pneg %p198
        %p602 = pneg %p195
        %p603 = scmp.lt.s32.totalorder %s40, 1
        %s604 = scalar_select %p603, %s40, 1
        %s605 = scalar_lea.vmem %s6, %s604
        %p606 = pneg %p224
        %p607 = pneg %p221
        %s608 = sand.u32 %s237, 1
        %s609 = scalar_lea.sflag [#allocation3], %s608
        %s610 = sand.u32 %s237, 1
        %s611 = scalar_lea.vmem [#allocation2], %s610
        %p612 = pneg %p250
        %p613 = pneg %p247
        %s614 = sand.u32 %s35, 1
        %s615 = scalar_lea.sflag [#allocation6], %s614
        %s616 = sand.u32 %s263, 1
        %s617 = smul.addr %s616, 32
        %s618 = scalar_lea.vmem [#allocation5], %s617
        %p619 = pneg %p276
        %p620 = pneg %p273
        %s621 = sand.u32 %s35, 1
        %s622 = scalar_lea.sflag [#allocation6], %s621
        %s623 = sand.u32 %s289, 1
        %s624 = scalar_lea.vmem [#allocation7], %s623
        %p625 = pneg %p302
        %p626 = pneg %p299
        %p627 = scmp.lt.s32.totalorder %s40, 1
        %s628 = scalar_select %p627, %s40, 1
        %s629 = smul.addr %s628, 16
        %s630 = smul.addr %s629, 4
        %s631 = scalar_lea.vmem %s10, %s630
        %p632 = pneg %p328
        %p633 = pneg %p325
        %s634 = sand.u32 %s341, 1
        %s635 = scalar_lea.sflag [#allocation9], %s634
        %s636 = sand.u32 %s341, 1
        %s637 = scalar_lea.vmem [#allocation8], %s636
        %p638 = pneg %p354
        %p639 = pneg %p351
        %p640 = pneg %p380
        %p641 = pneg %p377
        %s642 = sand.u32 %s367, 1
        %s643 = scalar_lea.sflag [#allocation4], %s642
        %s644 = sand.u32 %s367, 1
        %s645 = smul.addr %s644, 16
        %s646 = scalar_lea.vmem [#allocation10], %s645
        %p647 = scmp.lt.s32.totalorder %s39, 1
        %s648 = scalar_select %p647, %s39, 1
        %s649 = smul.addr %s648, 2
        %s650 = smul.addr %s649, 8
        %s651 = scalar_lea.vmem %s0, %s650
        %p652 = scmp.lt.s32.totalorder %s40, 1
        %s653 = scalar_select %p652, %s40, 1
        %s654 = scalar_lea.vmem %s1, %s653
        %p655 = scmp.lt.s32.totalorder %s40, 1
        %s656 = scalar_select %p655, %s40, 1
        %s657 = scalar_lea.vmem %s2, %s656
        %p658 = scmp.lt.s32.totalorder %s40, 1
        %s659 = scalar_select %p658, %s40, 1
        %s660 = smul.addr %s659, 16
        %s661 = smul.addr %s660, 4
        %s662 = scalar_lea.vmem %s3, %s661
        %p663 = scmp.lt.s32.totalorder %s40, 1
        %s664 = scalar_select %p663, %s40, 1
        %s665 = smul.addr %s664, 8
        %s666 = smul.addr %s665, 4
        %s667 = scalar_lea.vmem %s4, %s666
        %p668 = scmp.lt.s32.totalorder %s40, 1
        %s669 = scalar_select %p668, %s40, 1
        %s670 = scalar_lea.vmem %s5, %s669
        %p671 = scmp.lt.s32.totalorder %s40, 1
        %s672 = scalar_select %p671, %s40, 1
        %s673 = scalar_lea.vmem %s6, %s672
        %p674 = scmp.lt.s32.totalorder %s40, 1
        %s675 = scalar_select %p674, %s40, 1
        %s676 = smul.addr %s675, 16
        %s677 = smul.addr %s676, 4
        %s678 = scalar_lea.vmem %s10, %s677
        %p680 = scmp.eq.s32.totalorder %s40, 0
        // Predicated region
        $region85: #{transformer_forward.1} parent=67 // pred_check
          %p681 = pneg %p680
        $region86: #{transformer_forward.1} parent=67 // pred_check_branch
          %683 = sbr.rel (%p681) target = $region88
        $region87: #{transformer_forward.1} parent=67 // pred_region
          %v684 = vld [vmem:[%s651] sm:$0xff]
          %v685 = vld [vmem:[%s651 + $0x8] sm:$0xff]
          %vm686 = vcmask 523264
          %687 = vst.msk [vmem:[%s646] sm:$0xff] %vm686, %v684
          %688 = vst.msk [vmem:[%s646 + $0x8] sm:$0xff] %vm686, %v685
        $region88: #{transformer_forward.1} parent=67 // pred_fallthru
          _
        %v689 = vld [vmem:[%s646] sm:$0xff]
        %v690 = vld [vmem:[%s646 + $0x8] sm:$0xff]
        %v691 = vld [vmem:[%s654] sm:$0x1]
        %v692 = vld [vmem:[%s657] sm:$0x1]
        %vm693 = vcmask 523264
        %v694 = vsel %vm693, %v689, 0.0
        %695 = vadd.xlane.f32.xlu0 %v694
        %v696 = vpop.xlane.xlu0 %695
        %v697 = vsel %vm693, %v690, 0.0
        %698 = vadd.xlane.f32.xlu0 %v697
        %v699 = vpop.xlane.xlu0 %698
        %v700 = vrcp.pop 64.0
        %v701 = vmul.f32 %v696, %v700
        %v702 = vmul.f32 %v699, %v700
        %v703 = vsub.f32 %v689, %v701
        %v704 = vsub.f32 %v690, %v702
        %v705 = vmul.f32 %v703, %v703
        %v706 = vmul.f32 %v704, %v704
        %v707 = vsel %vm693, %v705, 0.0
        %708 = vadd.xlane.f32.xlu0 %v707
        %v709 = vpop.xlane.xlu0 %708
        %v710 = vsel %vm693, %v706, 0.0
        %711 = vadd.xlane.f32.xlu0 %v710
        %v712 = vpop.xlane.xlu0 %711
        %v713 = vmul.f32 %v709, %v700
        %v714 = vmul.f32 %v712, %v700
        %v715 = vadd.f32 %v713, 1e-05
        %v716 = vadd.f32 %v714, 1e-05
        %v717 = vrsqrt.pop %v715
        %v718 = vrsqrt.pop %v716
        %v719 = vmul.f32 %v703, %v717
        %v720 = vmul.f32 %v704, %v718
        %v722 = vlaneseq
        %v723 = vshrl.u32 %v722, 7
        %v724 = vsub.s32 0, %v723
        %v725 = vrot.slane %v691, %v724
        %v727 = vmul.f32 %v719, %v725
        %v728 = vmul.f32 %v720, %v725
        %v730 = vlaneseq
        %v731 = vshrl.u32 %v730, 7
        %v732 = vsub.s32 0, %v731
        %v733 = vrot.slane %v692, %v732
        %v735 = vadd.f32 %v727, %v733
        %v736 = vadd.f32 %v728, %v733
        %v737 = vpack.c.bf16 %v736, %v735
        %v738 = vld [vmem:[%s662] sm:$0xff]
        %v739 = vld [vmem:[%s662 + $0x8] sm:$0xff]
        %v740 = vld [vmem:[%s662 + $0x10] sm:$0xff]
        %v741 = vld [vmem:[%s662 + $0x18] sm:$0xff]
        %v742 = vld [vmem:[%s662 + $0x20] sm:$0xff]
        %v743 = vld [vmem:[%s662 + $0x28] sm:$0xff]
        %v744 = vld [vmem:[%s662 + $0x30] sm:$0xff]
        %v745 = vld [vmem:[%s662 + $0x38] sm:$0xff]
        %v754 = vunpack.c.l.b16 %v738
        %v755 = vunpack.c.h.b16 %v738
        %v756 = vunpack.c.l.b16 %v739
        %v757 = vunpack.c.h.b16 %v739
        %v758 = vunpack.c.l.b16 %v740
        %v759 = vunpack.c.h.b16 %v740
        %v760 = vunpack.c.l.b16 %v741
        %v761 = vunpack.c.h.b16 %v741
        %v762 = vunpack.c.l.b16 %v742
        %v763 = vunpack.c.h.b16 %v742
        %v764 = vunpack.c.l.b16 %v743
        %v765 = vunpack.c.h.b16 %v743
        %v766 = vunpack.c.l.b16 %v744
        %v767 = vunpack.c.h.b16 %v744
        %v768 = vunpack.c.l.b16 %v745
        %v769 = vunpack.c.h.b16 %v745
        %v770 = vpack.c.b16 %v756, %v754
        %v771 = vpack.c.b16 %v757, %v755
        %v772 = vpack.c.b16 %v760, %v758
        %v773 = vpack.c.b16 %v761, %v759
        %v774 = vpack.c.b16 %v764, %v762
        %v775 = vpack.c.b16 %v765, %v763
        %v776 = vpack.c.b16 %v768, %v766
        %v777 = vpack.c.b16 %v769, %v767
        %v787 = vsel %vm693, %v737, 0
        %789 = vmatprep.subr.bf16.mxu0 %v771
        %790 = vmatpush1.bf16.msra.mxu0 %v770
        %791 = vmatprep.subr.bf16.mxu0 %v773
        %792 = vmatpush1.bf16.msra.mxu0 %v772
        %793 = vmatprep.subr.bf16.mxu0 %v775
        %794 = vmatpush1.bf16.msra.mxu0 %v774
        %795 = vmatprep.subr.bf16.mxu0 %v777
        %796 = vmatpush1.bf16.msra.mxu0 %v776
        %797 = vmatprep.subr.bf16.mxu0 0
        %798 = vmatpush1.bf16.msra.mxu0 0
        %799 = vmatprep.subr.bf16.mxu0 0
        %800 = vmatpush1.bf16.msra.mxu0 0
        %801 = vmatprep.subr.bf16.mxu0 0
        %802 = vmatpush1.bf16.msra.mxu0 0
        %803 = vmatprep.subr.bf16.mxu0 0
        %804 = vmatpush1.bf16.msra.mxu0 0
        %805 = vmatprep.subr.bf16.mxu0 0
        %806 = vmatpush1.bf16.msra.mxu0 0
        %807 = vmatprep.subr.bf16.mxu0 0
        %808 = vmatpush1.bf16.msra.mxu0 0
        %809 = vmatprep.subr.bf16.mxu0 0
        %810 = vmatpush1.bf16.msra.mxu0 0
        %811 = vmatprep.subr.bf16.mxu0 0
        %812 = vmatpush1.bf16.msra.mxu0 0
        %813 = vmatprep.subr.bf16.mxu0 0
        %814 = vmatpush1.bf16.msra.mxu0 0
        %815 = vmatprep.subr.bf16.mxu0 0
        %816 = vmatpush1.bf16.msra.mxu0 0
        %817 = vmatprep.subr.bf16.mxu0 0
        %818 = vmatpush1.bf16.msra.mxu0 0
        %819 = vmatprep.subr.bf16.mxu0 0
        %820 = vmatpush1.bf16.msra.mxu0 0
        %821 = vmatprep.mubr.bf16.mxu0 0
        %822 = vmatmul.mubr.bf16.gmra.mrb[0].mxu0 %v787
        %v823 = vpop.f32.mrb[0].mxu0
        %v824 = vadd.f32 0.0, %v823
        %v825 = vpop.f32.mrb[0].mxu0
        %v826 = vadd.f32 0.0, %v825
        %v827 = vpop.f32.mrb[0].mxu0
        %v828 = vadd.f32 0.0, %v827
        %v829 = vpop.f32.mrb[0].mxu0
        %v830 = vadd.f32 0.0, %v829
        %831 = vdwg.mxu0
        %v832 = vpack.c.bf16 %v828, %v824
        %v833 = vpack.c.bf16 %v830, %v826
        %835 = vrot.lane.b32.xlu0 %v832, 64
        %v836 = vpop.permute.xlu0 %835
        %vm837 = vcmask 130048
        %v839 = vsel %vm837, %v832, 0
        %v842 = vsel %vm837, %v836, 0
        %844 = vmatprep.subr.bf16.mxu0 0
        %845 = vmatpush1.bf16.xpose.msra.mxu0 %v842
        %846 = vmatprep.subr.bf16.mxu0 0
        %847 = vmatpush1.bf16.xpose.msra.mxu0 0
        %848 = vmatprep.subr.bf16.mxu0 0
        %849 = vmatpush1.bf16.xpose.msra.mxu0 0
        %850 = vmatprep.subr.bf16.mxu0 0
        %851 = vmatpush1.bf16.xpose.msra.mxu0 0
        %852 = vmatprep.subr.bf16.mxu0 0
        %853 = vmatpush1.bf16.xpose.msra.mxu0 0
        %854 = vmatprep.subr.bf16.mxu0 0
        %855 = vmatpush1.bf16.xpose.msra.mxu0 0
        %856 = vmatprep.subr.bf16.mxu0 0
        %857 = vmatpush1.bf16.xpose.msra.mxu0 0
        %858 = vmatprep.subr.bf16.mxu0 0
        %859 = vmatpush1.bf16.xpose.msra.mxu0 0
        %860 = vmatprep.subr.bf16.mxu0 0
        %861 = vmatpush1.bf16.xpose.msra.mxu0 0
        %862 = vmatprep.subr.bf16.mxu0 0
        %863 = vmatpush1.bf16.xpose.msra.mxu0 0
        %864 = vmatprep.subr.bf16.mxu0 0
        %865 = vmatpush1.bf16.xpose.msra.mxu0 0
        %866 = vmatprep.subr.bf16.mxu0 0
        %867 = vmatpush1.bf16.xpose.msra.mxu0 0
        %868 = vmatprep.subr.bf16.mxu0 0
        %869 = vmatpush1.bf16.xpose.msra.mxu0 0
        %870 = vmatprep.subr.bf16.mxu0 0
        %871 = vmatpush1.bf16.xpose.msra.mxu0 0
        %872 = vmatprep.subr.bf16.mxu0 0
        %873 = vmatpush1.bf16.xpose.msra.mxu0 0
        %874 = vmatprep.subr.bf16.mxu0 0
        %875 = vmatpush1.bf16.xpose.msra.mxu0 0
        %876 = vmatprep.mubr.bf16.mxu0 0
        %877 = vmatmul.mubr.bf16.gmra.mrb[0].mxu0 %v839
        %v878 = vpop.f32.mrb[0].mxu0
        %v879 = vadd.f32 0.0, %v878
        %v880 = vpop.f32.mrb[0].mxu0
        %v881 = vpop.f32.mrb[0].mxu0
        %v882 = vadd.f32 0.0, %v881
        %v883 = vpop.f32.mrb[0].mxu0
        %884 = vdwg.mxu0
        %v885 = vmul.f32 %v879, 0.25
        %v886 = vmul.f32 %v882, 0.25
        %v887 = vsel %vm837, %v885, -inf
        %888 = vmax.xlane.f32.xlu0 %v887
        %v889 = vpop.xlane.xlu0 %888
        %v890 = vsel %vm837, %v886, -inf
        %891 = vmax.xlane.f32.xlu0 %v890
        %v892 = vpop.xlane.xlu0 %891
        %v893 = vsub.f32 %v885, %v889
        %v894 = vsub.f32 %v886, %v892
        %v895 = vmul.f32 %v893, 1.442695
        %v896 = vpow.pop %v895
        %v897 = vmul.f32 %v894, 1.442695
        %v898 = vpow.pop %v897
        %v899 = vsel %vm837, %v896, 0.0
        %900 = vadd.xlane.f32.xlu0 %v899
        %v901 = vpop.xlane.xlu0 %900
        %v902 = vsel %vm837, %v898, 0.0
        %903 = vadd.xlane.f32.xlu0 %v902
        %v904 = vpop.xlane.xlu0 %903
        %v905 = vrcp.pop %v901
        %v906 = vrcp.pop %v904
        %v907 = vmul.f32 %v896, %v905
        %v908 = vmul.f32 %v898, %v906
        %v909 = vpack.c.bf16 %v908, %v907
        %v911 = vsel %vm837, %v909, 0
        %913 = vmatprep.subr.bf16.mxu0 0
        %914 = vmatpush1.bf16.msra.mxu0 %v833
        %915 = vmatprep.subr.bf16.mxu0 0
        %916 = vmatpush1.bf16.msra.mxu0 0
        %917 = vmatprep.subr.bf16.mxu0 0
        %918 = vmatpush1.bf16.msra.mxu0 0
        %919 = vmatprep.subr.bf16.mxu0 0
        %920 = vmatpush1.bf16.msra.mxu0 0
        %921 = vmatprep.subr.bf16.mxu0 0
        %922 = vmatpush1.bf16.msra.mxu0 0
        %923 = vmatprep.subr.bf16.mxu0 0
        %924 = vmatpush1.bf16.msra.mxu0 0
        %925 = vmatprep.subr.bf16.mxu0 0
        %926 = vmatpush1.bf16.msra.mxu0 0
        %927 = vmatprep.subr.bf16.mxu0 0
        %928 = vmatpush1.bf16.msra.mxu0 0
        %929 = vmatprep.subr.bf16.mxu0 0
        %930 = vmatpush1.bf16.msra.mxu0 0
        %931 = vmatprep.subr.bf16.mxu0 0
        %932 = vmatpush1.bf16.msra.mxu0 0
        %933 = vmatprep.subr.bf16.mxu0 0
        %934 = vmatpush1.bf16.msra.mxu0 0
        %935 = vmatprep.subr.bf16.mxu0 0
        %936 = vmatpush1.bf16.msra.mxu0 0
        %937 = vmatprep.subr.bf16.mxu0 0
        %938 = vmatpush1.bf16.msra.mxu0 0
        %939 = vmatprep.subr.bf16.mxu0 0
        %940 = vmatpush1.bf16.msra.mxu0 0
        %941 = vmatprep.subr.bf16.mxu0 0
        %942 = vmatpush1.bf16.msra.mxu0 0
        %943 = vmatprep.subr.bf16.mxu0 0
        %944 = vmatpush1.bf16.msra.mxu0 0
        %945 = vmatprep.mubr.bf16.mxu0 0
        %946 = vmatmul.mubr.bf16.gmra.mrb[0].mxu0 %v911
        %v947 = vpop.f32.mrb[0].mxu0
        %v948 = vadd.f32 0.0, %v947
        %v949 = vpop.f32.mrb[0].mxu0
        %v950 = vpop.f32.mrb[0].mxu0
        %v951 = vadd.f32 0.0, %v950
        %v952 = vpop.f32.mrb[0].mxu0
        %953 = vdwg.mxu0
        %954 = vrot.lane.b32.xlu0 %v832, 112
        %v955 = vpop.permute.xlu0 %954
        %956 = vrot.lane.b32.xlu0 %v832, 48
        %v957 = vpop.permute.xlu0 %956
        %v959 = vsel %vm837, %v955, 0
        %v962 = vsel %vm837, %v957, 0
        %964 = vmatprep.subr.bf16.mxu0 0
        %965 = vmatpush1.bf16.xpose.msra.mxu0 %v962
        %966 = vmatprep.subr.bf16.mxu0 0
        %967 = vmatpush1.bf16.xpose.msra.mxu0 0
        %968 = vmatprep.subr.bf16.mxu0 0
        %969 = vmatpush1.bf16.xpose.msra.mxu0 0
        %970 = vmatprep.subr.bf16.mxu0 0
        %971 = vmatpush1.bf16.xpose.msra.mxu0 0
        %972 = vmatprep.subr.bf16.mxu0 0
        %973 = vmatpush1.bf16.xpose.msra.mxu0 0
        %974 = vmatprep.subr.bf16.mxu0 0
        %975 = vmatpush1.bf16.xpose.msra.mxu0 0
        %976 = vmatprep.subr.bf16.mxu0 0
        %977 = vmatpush1.bf16.xpose.msra.mxu0 0
        %978 = vmatprep.subr.bf16.mxu0 0
        %979 = vmatpush1.bf16.xpose.msra.mxu0 0
        %980 = vmatprep.subr.bf16.mxu0 0
        %981 = vmatpush1.bf16.xpose.msra.mxu0 0
        %982 = vmatprep.subr.bf16.mxu0 0
        %983 = vmatpush1.bf16.xpose.msra.mxu0 0
        %984 = vmatprep.subr.bf16.mxu0 0
        %985 = vmatpush1.bf16.xpose.msra.mxu0 0
        %986 = vmatprep.subr.bf16.mxu0 0
        %987 = vmatpush1.bf16.xpose.msra.mxu0 0
        %988 = vmatprep.subr.bf16.mxu0 0
        %989 = vmatpush1.bf16.xpose.msra.mxu0 0
        %990 = vmatprep.subr.bf16.mxu0 0
        %991 = vmatpush1.bf16.xpose.msra.mxu0 0
        %992 = vmatprep.subr.bf16.mxu0 0
        %993 = vmatpush1.bf16.xpose.msra.mxu0 0
        %994 = vmatprep.subr.bf16.mxu0 0
        %995 = vmatpush1.bf16.xpose.msra.mxu0 0
        %996 = vmatprep.mubr.bf16.mxu0 0
        %997 = vmatmul.mubr.bf16.gmra.mrb[0].mxu0 %v959
        %v998 = vpop.f32.mrb[0].mxu0
        %v999 = vadd.f32 0.0, %v998
        %v1000 = vpop.f32.mrb[0].mxu0
        %v1001 = vpop.f32.mrb[0].mxu0
        %v1002 = vadd.f32 0.0, %v1001
        %v1003 = vpop.f32.mrb[0].mxu0
        %1004 = vdwg.mxu0
        %v1005 = vmul.f32 %v999, 0.25
        %v1006 = vmul.f32 %v1002, 0.25
        %v1007 = vsel %vm837, %v1005, -inf
        %1008 = vmax.xlane.f32.xlu0 %v1007
        %v1009 = vpop.xlane.xlu0 %1008
        %v1010 = vsel %vm837, %v1006, -inf
        %1011 = vmax.xlane.f32.xlu0 %v1010
        %v1012 = vpop.xlane.xlu0 %1011
        %v1013 = vsub.f32 %v1005, %v1009
        %v1014 = vsub.f32 %v1006, %v1012
        %v1015 = vmul.f32 %v1013, 1.442695
        %v1016 = vpow.pop %v1015
        %v1017 = vmul.f32 %v1014, 1.442695
        %v1018 = vpow.pop %v1017
        %v1019 = vsel %vm837, %v1016, 0.0
        %1020 = vadd.xlane.f32.xlu0 %v1019
        %v1021 = vpop.xlane.xlu0 %1020
        %v1022 = vsel %vm837, %v1018, 0.0
        %1023 = vadd.xlane.f32.xlu0 %v1022
        %v1024 = vpop.xlane.xlu0 %1023
        %v1025 = vrcp.pop %v1021
        %v1026 = vrcp.pop %v1024
        %v1027 = vmul.f32 %v1016, %v1025
        %v1028 = vmul.f32 %v1018, %v1026
        %v1029 = vpack.c.bf16 %v1028, %v1027
        %1031 = vrot.lane.b32.xlu0 %v833, 112
        %v1032 = vpop.permute.xlu0 %1031
        %v1035 = vsel %vm837, %v1029, 0
        %1037 = vmatprep.subr.bf16.mxu0 0
        %1038 = vmatpush1.bf16.msra.mxu0 %v1032
        %1039 = vmatprep.subr.bf16.mxu0 0
        %1040 = vmatpush1.bf16.msra.mxu0 0
        %1041 = vmatprep.subr.bf16.mxu0 0
        %1042 = vmatpush1.bf16.msra.mxu0 0
        %1043 = vmatprep.subr.bf16.mxu0 0
        %1044 = vmatpush1.bf16.msra.mxu0 0
        %1045 = vmatprep.subr.bf16.mxu0 0
        %1046 = vmatpush1.bf16.msra.mxu0 0
        %1047 = vmatprep.subr.bf16.mxu0 0
        %1048 = vmatpush1.bf16.msra.mxu0 0
        %1049 = vmatprep.subr.bf16.mxu0 0
        %1050 = vmatpush1.bf16.msra.mxu0 0
        %1051 = vmatprep.subr.bf16.mxu0 0
        %1052 = vmatpush1.bf16.msra.mxu0 0
        %1053 = vmatprep.subr.bf16.mxu0 0
        %1054 = vmatpush1.bf16.msra.mxu0 0
        %1055 = vmatprep.subr.bf16.mxu0 0
        %1056 = vmatpush1.bf16.msra.mxu0 0
        %1057 = vmatprep.subr.bf16.mxu0 0
        %1058 = vmatpush1.bf16.msra.mxu0 0
        %1059 = vmatprep.subr.bf16.mxu0 0
        %1060 = vmatpush1.bf16.msra.mxu0 0
        %1061 = vmatprep.subr.bf16.mxu0 0
        %1062 = vmatpush1.bf16.msra.mxu0 0
        %1063 = vmatprep.subr.bf16.mxu0 0
        %1064 = vmatpush1.bf16.msra.mxu0 0
        %1065 = vmatprep.subr.bf16.mxu0 0
        %1066 = vmatpush1.bf16.msra.mxu0 0
        %1067 = vmatprep.subr.bf16.mxu0 0
        %1068 = vmatpush1.bf16.msra.mxu0 0
        %1069 = vmatprep.mubr.bf16.mxu0 0
        %1070 = vmatmul.mubr.bf16.gmra.mrb[0].mxu0 %v1035
        %v1071 = vpop.f32.mrb[0].mxu0
        %v1072 = vadd.f32 0.0, %v1071
        %v1073 = vpop.f32.mrb[0].mxu0
        %v1074 = vpop.f32.mrb[0].mxu0
        %v1075 = vadd.f32 0.0, %v1074
        %v1076 = vpop.f32.mrb[0].mxu0
        %1077 = vdwg.mxu0
        %1078 = vrot.lane.b32.xlu0 %v832, 96
        %v1079 = vpop.permute.xlu0 %1078
        %1080 = vrot.lane.b32.xlu0 %v832, 32
        %v1081 = vpop.permute.xlu0 %1080
        %v1083 = vsel %vm837, %v1079, 0
        %v1086 = vsel %vm837, %v1081, 0
        %1088 = vmatprep.subr.bf16.mxu0 0
        %1089 = vmatpush1.bf16.xpose.msra.mxu0 %v1086
        %1090 = vmatprep.subr.bf16.mxu0 0
        %1091 = vmatpush1.bf16.xpose.msra.mxu0 0
        %1092 = vmatprep.subr.bf16.mxu0 0
        %1093 = vmatpush1.bf16.xpose.msra.mxu0 0
        %1094 = vmatprep.subr.bf16.mxu0 0
        %1095 = vmatpush1.bf16.xpose.msra.mxu0 0
        %1096 = vmatprep.subr.bf16.mxu0 0
        %1097 = vmatpush1.bf16.xpose.msra.mxu0 0
        %1098 = vmatprep.subr.bf16.mxu0 0
        %1099 = vmatpush1.bf16.xpose.msra.mxu0 0
        %1100 = vmatprep.subr.bf16.mxu0 0
        %1101 = vmatpush1.bf16.xpose.msra.mxu0 0
        %1102 = vmatprep.subr.bf16.mxu0 0
        %1103 = vmatpush1.bf16.xpose.msra.mxu0 0
        %1104 = vmatprep.subr.bf16.mxu0 0
        %1105 = vmatpush1.bf16.xpose.msra.mxu0 0
        %1106 = vmatprep.subr.bf16.mxu0 0
        %1107 = vmatpush1.bf16.xpose.msra.mxu0 0
        %1108 = vmatprep.subr.bf16.mxu0 0
        %1109 = vmatpush1.bf16.xpose.msra.mxu0 0
        %1110 = vmatprep.subr.bf16.mxu0 0
        %1111 = vmatpush1.bf16.xpose.msra.mxu0 0
        %1112 = vmatprep.subr.bf16.mxu0 0
        %1113 = vmatpush1.bf16.xpose.msra.mxu0 0
        %1114 = vmatprep.subr.bf16.mxu0 0
        %1115 = vmatpush1.bf16.xpose.msra.mxu0 0
        %1116 = vmatprep.subr.bf16.mxu0 0
        %1117 = vmatpush1.bf16.xpose.msra.mxu0 0
        %1118 = vmatprep.subr.bf16.mxu0 0
        %1119 = vmatpush1.bf16.xpose.msra.mxu0 0
        %1120 = vmatprep.mubr.bf16.mxu0 0
        %1121 = vmatmul.mubr.bf16.gmra.mrb[0].mxu0 %v1083
        %v1122 = vpop.f32.mrb[0].mxu0
        %v1123 = vadd.f32 0.0, %v1122
        %v1124 = vpop.f32.mrb[0].mxu0
        %v1125 = vpop.f32.mrb[0].mxu0
        %v1126 = vadd.f32 0.0, %v1125
        %v1127 = vpop.f32.mrb[0].mxu0
        %1128 = vdwg.mxu0
        %v1129 = vmul.f32 %v1123, 0.25
        %v1130 = vmul.f32 %v1126, 0.25
        %v1131 = vsel %vm837, %v1129, -inf
        %1132 = vmax.xlane.f32.xlu0 %v1131
        %v1133 = vpop.xlane.xlu0 %1132
        %v1134 = vsel %vm837, %v1130, -inf
        %1135 = vmax.xlane.f32.xlu0 %v1134
        %v1136 = vpop.xlane.xlu0 %1135
        %v1137 = vsub.f32 %v1129, %v1133
        %v1138 = vsub.f32 %v1130, %v1136
        %v1139 = vmul.f32 %v1137, 1.442695
        %v1140 = vpow.pop %v1139
        %v1141 = vmul.f32 %v1138, 1.442695
        %v1142 = vpow.pop %v1141
        %v1143 = vsel %vm837, %v1140, 0.0
        %1144 = vadd.xlane.f32.xlu0 %v1143
        %v1145 = vpop.xlane.xlu0 %1144
        %v1146 = vsel %vm837, %v1142, 0.0
        %1147 = vadd.xlane.f32.xlu0 %v1146
        %v1148 = vpop.xlane.xlu0 %1147
        %v1149 = vrcp.pop %v1145
        %v1150 = vrcp.pop %v1148
        %v1151 = vmul.f32 %v1140, %v1149
        %v1152 = vmul.f32 %v1142, %v1150
        %v1153 = vpack.c.bf16 %v1152, %v1151
        %1154 = vrot.lane.b32.xlu0 %v833, 96
        %v1155 = vpop.permute.xlu0 %1154
        %v1158 = vsel %vm837, %v1153, 0
        %1160 = vmatprep.subr.bf16.mxu0 0
        %1161 = vmatpush1.bf16.msra.mxu0 %v1155
        %1162 = vmatprep.subr.bf16.mxu0 0
        %1163 = vmatpush1.bf16.msra.mxu0 0
        %1164 = vmatprep.subr.bf16.mxu0 0
        %1165 = vmatpush1.bf16.msra.mxu0 0
        %1166 = vmatprep.subr.bf16.mxu0 0
        %1167 = vmatpush1.bf16.msra.mxu0 0
        %1168 = vmatprep.subr.bf16.mxu0 0
        %1169 = vmatpush1.bf16.msra.mxu0 0
        %1170 = vmatprep.subr.bf16.mxu0 0
        %1171 = vmatpush1.bf16.msra.mxu0 0
        %1172 = vmatprep.subr.bf16.mxu0 0
        %1173 = vmatpush1.bf16.msra.mxu0 0
        %1174 = vmatprep.subr.bf16.mxu0 0
        %1175 = vmatpush1.bf16.msra.mxu0 0
        %1176 = vmatprep.subr.bf16.mxu0 0
        %1177 = vmatpush1.bf16.msra.mxu0 0
        %1178 = vmatprep.subr.bf16.mxu0 0
        %1179 = vmatpush1.bf16.msra.mxu0 0
        %1180 = vmatprep.subr.bf16.mxu0 0
        %1181 = vmatpush1.bf16.msra.mxu0 0
        %1182 = vmatprep.subr.bf16.mxu0 0
        %1183 = vmatpush1.bf16.msra.mxu0 0
        %1184 = vmatprep.subr.bf16.mxu0 0
        %1185 = vmatpush1.bf16.msra.mxu0 0
        %1186 = vmatprep.subr.bf16.mxu0 0
        %1187 = vmatpush1.bf16.msra.mxu0 0
        %1188 = vmatprep.subr.bf16.mxu0 0
        %1189 = vmatpush1.bf16.msra.mxu0 0
        %1190 = vmatprep.subr.bf16.mxu0 0
        %1191 = vmatpush1.bf16.msra.mxu0 0
        %1192 = vmatprep.mubr.bf16.mxu0 0
        %1193 = vmatmul.mubr.bf16.gmra.mrb[0].mxu0 %v1158
        %v1194 = vpop.f32.mrb[0].mxu0
        %v1195 = vadd.f32 0.0, %v1194
        %v1196 = vpop.f32.mrb[0].mxu0
        %v1197 = vpop.f32.mrb[0].mxu0
        %v1198 = vadd.f32 0.0, %v1197
        %v1199 = vpop.f32.mrb[0].mxu0
        %1200 = vdwg.mxu0
        %1201 = vrot.lane.b32.xlu0 %v832, 80
        %v1202 = vpop.permute.xlu0 %1201
        %1203 = vrot.lane.b32.xlu0 %v832, 16
        %v1204 = vpop.permute.xlu0 %1203
        %v1206 = vsel %vm837, %v1202, 0
        %v1209 = vsel %vm837, %v1204, 0
        %1211 = vmatprep.subr.bf16.mxu0 0
        %1212 = vmatpush1.bf16.xpose.msra.mxu0 %v1209
        %1213 = vmatprep.subr.bf16.mxu0 0
        %1214 = vmatpush1.bf16.xpose.msra.mxu0 0
        %1215 = vmatprep.subr.bf16.mxu0 0
        %1216 = vmatpush1.bf16.xpose.msra.mxu0 0
        %1217 = vmatprep.subr.bf16.mxu0 0
        %1218 = vmatpush1.bf16.xpose.msra.mxu0 0
        %1219 = vmatprep.subr.bf16.mxu0 0
        %1220 = vmatpush1.bf16.xpose.msra.mxu0 0
        %1221 = vmatprep.subr.bf16.mxu0 0
        %1222 = vmatpush1.bf16.xpose.msra.mxu0 0
        %1223 = vmatprep.subr.bf16.mxu0 0
        %1224 = vmatpush1.bf16.xpose.msra.mxu0 0
        %1225 = vmatprep.subr.bf16.mxu0 0
        %1226 = vmatpush1.bf16.xpose.msra.mxu0 0
        %1227 = vmatprep.subr.bf16.mxu0 0
        %1228 = vmatpush1.bf16.xpose.msra.mxu0 0
        %1229 = vmatprep.subr.bf16.mxu0 0
        %1230 = vmatpush1.bf16.xpose.msra.mxu0 0
        %1231 = vmatprep.subr.bf16.mxu0 0
        %1232 = vmatpush1.bf16.xpose.msra.mxu0 0
        %1233 = vmatprep.subr.bf16.mxu0 0
        %1234 = vmatpush1.bf16.xpose.msra.mxu0 0
        %1235 = vmatprep.subr.bf16.mxu0 0
        %1236 = vmatpush1.bf16.xpose.msra.mxu0 0
        %1237 = vmatprep.subr.bf16.mxu0 0
        %1238 = vmatpush1.bf16.xpose.msra.mxu0 0
        %1239 = vmatprep.subr.bf16.mxu0 0
        %1240 = vmatpush1.bf16.xpose.msra.mxu0 0
        %1241 = vmatprep.subr.bf16.mxu0 0
        %1242 = vmatpush1.bf16.xpose.msra.mxu0 0
        %1243 = vmatprep.mubr.bf16.mxu0 0
        %1244 = vmatmul.mubr.bf16.gmra.mrb[0].mxu0 %v1206
        %v1245 = vpop.f32.mrb[0].mxu0
        %v1246 = vadd.f32 0.0, %v1245
        %v1247 = vpop.f32.mrb[0].mxu0
        %v1248 = vpop.f32.mrb[0].mxu0
        %v1249 = vadd.f32 0.0, %v1248
        %v1250 = vpop.f32.mrb[0].mxu0
        %1251 = vdwg.mxu0
        %v1252 = vmul.f32 %v1246, 0.25
        %v1253 = vmul.f32 %v1249, 0.25
        %v1254 = vsel %vm837, %v1252, -inf
        %1255 = vmax.xlane.f32.xlu0 %v1254
        %v1256 = vpop.xlane.xlu0 %1255
        %v1257 = vsel %vm837, %v1253, -inf
        %1258 = vmax.xlane.f32.xlu0 %v1257
        %v1259 = vpop.xlane.xlu0 %1258
        %v1260 = vsub.f32 %v1252, %v1256
        %v1261 = vsub.f32 %v1253, %v1259
        %v1262 = vmul.f32 %v1260, 1.442695
        %v1263 = vpow.pop %v1262
        %v1264 = vmul.f32 %v1261, 1.442695
        %v1265 = vpow.pop %v1264
        %v1266 = vsel %vm837, %v1263, 0.0
        %1267 = vadd.xlane.f32.xlu0 %v1266
        %v1268 = vpop.xlane.xlu0 %1267
        %v1269 = vsel %vm837, %v1265, 0.0
        %1270 = vadd.xlane.f32.xlu0 %v1269
        %v1271 = vpop.xlane.xlu0 %1270
        %v1272 = vrcp.pop %v1268
        %v1273 = vrcp.pop %v1271
        %v1274 = vmul.f32 %v1263, %v1272
        %v1275 = vmul.f32 %v1265, %v1273
        %v1276 = vpack.c.bf16 %v1275, %v1274
        %1277 = vrot.lane.b32.xlu0 %v833, 80
        %v1278 = vpop.permute.xlu0 %1277
        %v1281 = vsel %vm837, %v1276, 0
        %1283 = vmatprep.subr.bf16.mxu0 0
        %1284 = vmatpush1.bf16.msra.mxu0 %v1278
        %1285 = vmatprep.subr.bf16.mxu0 0
        %1286 = vmatpush1.bf16.msra.mxu0 0
        %1287 = vmatprep.subr.bf16.mxu0 0
        %1288 = vmatpush1.bf16.msra.mxu0 0
        %1289 = vmatprep.subr.bf16.mxu0 0
        %1290 = vmatpush1.bf16.msra.mxu0 0
        %1291 = vmatprep.subr.bf16.mxu0 0
        %1292 = vmatpush1.bf16.msra.mxu0 0
        %1293 = vmatprep.subr.bf16.mxu0 0
        %1294 = vmatpush1.bf16.msra.mxu0 0
        %1295 = vmatprep.subr.bf16.mxu0 0
        %1296 = vmatpush1.bf16.msra.mxu0 0
        %1297 = vmatprep.subr.bf16.mxu0 0
        %1298 = vmatpush1.bf16.msra.mxu0 0
        %1299 = vmatprep.subr.bf16.mxu0 0
        %1300 = vmatpush1.bf16.msra.mxu0 0
        %1301 = vmatprep.subr.bf16.mxu0 0
        %1302 = vmatpush1.bf16.msra.mxu0 0
        %1303 = vmatprep.subr.bf16.mxu0 0
        %1304 = vmatpush1.bf16.msra.mxu0 0
        %1305 = vmatprep.subr.bf16.mxu0 0
        %1306 = vmatpush1.bf16.msra.mxu0 0
        %1307 = vmatprep.subr.bf16.mxu0 0
        %1308 = vmatpush1.bf16.msra.mxu0 0
        %1309 = vmatprep.subr.bf16.mxu0 0
        %1310 = vmatpush1.bf16.msra.mxu0 0
        %1311 = vmatprep.subr.bf16.mxu0 0
        %1312 = vmatpush1.bf16.msra.mxu0 0
        %1313 = vmatprep.subr.bf16.mxu0 0
        %1314 = vmatpush1.bf16.msra.mxu0 0
        %1315 = vmatprep.mubr.bf16.mxu0 0
        %1316 = vmatmul.mubr.bf16.gmra.mrb[0].mxu0 %v1281
        %v1317 = vpop.f32.mrb[0].mxu0
        %v1318 = vadd.f32 0.0, %v1317
        %v1319 = vpop.f32.mrb[0].mxu0
        %v1320 = vpop.f32.mrb[0].mxu0
        %v1321 = vadd.f32 0.0, %v1320
        %v1322 = vpop.f32.mrb[0].mxu0
        %1323 = vdwg.mxu0
        %1326 = vrot.lane.b32.xlu0 %v1072, 16
        %v1327 = vpop.permute.xlu0 %1326
        %1328 = vrot.lane.b32.xlu0 %v1075, 16
        %v1329 = vpop.permute.xlu0 %1328
        %1334 = vrot.lane.b32.xlu0 %v1195, 32
        %v1335 = vpop.permute.xlu0 %1334
        %1336 = vrot.lane.b32.xlu0 %v1198, 32
        %v1337 = vpop.permute.xlu0 %1336
        %1342 = vrot.lane.b32.xlu0 %v1318, 48
        %v1343 = vpop.permute.xlu0 %1342
        %1344 = vrot.lane.b32.xlu0 %v1321, 48
        %v1345 = vpop.permute.xlu0 %1344
        %v1348 = vsel %vm837, %v948, %v1327
        %v1349 = vsel %vm837, %v951, %v1329
        %vm1350 = vcmask 261120
        %v1351 = vsel %vm1350, %v1348, %v1335
        %v1352 = vsel %vm1350, %v1349, %v1337
        %vm1353 = vcmask 392192
        %v1354 = vsel %vm1353, %v1351, %v1343
        %v1355 = vsel %vm1353, %v1352, %v1345
        %v1356 = vpack.c.bf16 %v1355, %v1354
        %v1357 = vld [vmem:[%s667] sm:$0xf]
        %v1358 = vld [vmem:[%s667 + $0x4] sm:$0xf]
        %v1359 = vld [vmem:[%s667 + $0x8] sm:$0xf]
        %v1360 = vld [vmem:[%s667 + $0xc] sm:$0xf]
        %v1361 = vld [vmem:[%s667 + $0x10] sm:$0xf]
        %v1362 = vld [vmem:[%s667 + $0x14] sm:$0xf]
        %v1363 = vld [vmem:[%s667 + $0x18] sm:$0xf]
        %v1364 = vld [vmem:[%s667 + $0x1c] sm:$0xf]
        %v1365 = vld [vmem:[%s670] sm:$0x1]
        %v1367 = vlaneseq
        %v1368 = vshrl.u32 %v1367, 7
        %v1369 = vsub.s32 0, %v1368
        %v1370 = vrot.slane %v1365, %v1369
        %v1380 = vunpack.c.l.b16 %v1357
        %v1381 = vunpack.c.l.b16 %v1358
        %v1382 = vunpack.c.l.b16 %v1359
        %v1383 = vunpack.c.l.b16 %v1360
        %v1384 = vunpack.c.l.b16 %v1361
        %v1385 = vunpack.c.l.b16 %v1362
        %v1386 = vunpack.c.l.b16 %v1363
        %v1387 = vunpack.c.l.b16 %v1364
        %v1388 = vpack.c.b16 %v1381, %v1380
        %v1389 = vpack.c.b16 %v1383, %v1382
        %v1390 = vpack.c.b16 %v1385, %v1384
        %v1391 = vpack.c.b16 %v1387, %v1386
        %v1397 = vsel %vm693, %v1356, 0
        %1399 = vmatprep.subr.bf16.mxu0 0
        %1400 = vmatpush1.bf16.msra.mxu0 %v1388
        %1401 = vmatprep.subr.bf16.mxu0 0
        %1402 = vmatpush1.bf16.msra.mxu0 %v1389
        %1403 = vmatprep.subr.bf16.mxu0 0
        %1404 = vmatpush1.bf16.msra.mxu0 %v1390
        %1405 = vmatprep.subr.bf16.mxu0 0
        %1406 = vmatpush1.bf16.msra.mxu0 %v1391
        %1407 = vmatprep.subr.bf16.mxu0 0
        %1408 = vmatpush1.bf16.msra.mxu0 0
        %1409 = vmatprep.subr.bf16.mxu0 0
        %1410 = vmatpush1.bf16.msra.mxu0 0
        %1411 = vmatprep.subr.bf16.mxu0 0
        %1412 = vmatpush1.bf16.msra.mxu0 0
        %1413 = vmatprep.subr.bf16.mxu0 0
        %1414 = vmatpush1.bf16.msra.mxu0 0
        %1415 = vmatprep.subr.bf16.mxu0 0
        %1416 = vmatpush1.bf16.msra.mxu0 0
        %1417 = vmatprep.subr.bf16.mxu0 0
        %1418 = vmatpush1.bf16.msra.mxu0 0
        %1419 = vmatprep.subr.bf16.mxu0 0
        %1420 = vmatpush1.bf16.msra.mxu0 0
        %1421 = vmatprep.subr.bf16.mxu0 0
        %1422 = vmatpush1.bf16.msra.mxu0 0
        %1423 = vmatprep.subr.bf16.mxu0 0
        %1424 = vmatpush1.bf16.msra.mxu0 0
        %1425 = vmatprep.subr.bf16.mxu0 0
        %1426 = vmatpush1.bf16.msra.mxu0 0
        %1427 = vmatprep.subr.bf16.mxu0 0
        %1428 = vmatpush1.bf16.msra.mxu0 0
        %1429 = vmatprep.subr.bf16.mxu0 0
        %1430 = vmatpush1.bf16.msra.mxu0 0
        %1431 = vmatprep.mubr.bf16.mxu0 0
        %1432 = vmatmul.mubr.bf16.gmra.mrb[0].mxu0 %v1397
        %v1433 = vpop.f32.mrb[0].mxu0
        %v1434 = vadd.f32 %v1370, %v1433
        %v1435 = vpop.f32.mrb[0].mxu0
        %v1436 = vpop.f32.mrb[0].mxu0
        %v1437 = vadd.f32 %v1370, %v1436
        %v1438 = vpop.f32.mrb[0].mxu0
        %1439 = vdwg.mxu0
        %v1440 = vadd.f32 %v689, %v1434
        %v1441 = vadd.f32 %v690, %v1437
        %v1442 = vld [vmem:[%s673] sm:$0x1]
        %v1443 = vld [vmem:[%s537] sm:$0x1]
        %v1444 = vsel %vm693, %v1440, 0.0
        %1445 = vadd.xlane.f32.xlu0 %v1444
        %v1446 = vpop.xlane.xlu0 %1445
        %v1447 = vsel %vm693, %v1441, 0.0
        %1448 = vadd.xlane.f32.xlu0 %v1447
        %v1449 = vpop.xlane.xlu0 %1448
        %v1450 = vmul.f32 %v1446, %v700
        %v1451 = vmul.f32 %v1449, %v700
        %v1452 = vsub.f32 %v1440, %v1450
        %v1453 = vsub.f32 %v1441, %v1451
        %v1454 = vmul.f32 %v1452, %v1452
        %v1455 = vmul.f32 %v1453, %v1453
        %v1456 = vsel %vm693, %v1454, 0.0
        %1457 = vadd.xlane.f32.xlu0 %v1456
        %v1458 = vpop.xlane.xlu0 %1457
        %v1459 = vsel %vm693, %v1455, 0.0
        %1460 = vadd.xlane.f32.xlu0 %v1459
        %v1461 = vpop.xlane.xlu0 %1460
        %v1462 = vmul.f32 %v1458, %v700
        %v1463 = vmul.f32 %v1461, %v700
        %v1464 = vadd.f32 %v1462, 1e-05
        %v1465 = vadd.f32 %v1463, 1e-05
        %v1466 = vrsqrt.pop %v1464
        %v1467 = vrsqrt.pop %v1465
        %v1468 = vmul.f32 %v1452, %v1466
        %v1469 = vmul.f32 %v1453, %v1467
        %v1471 = vlaneseq
        %v1472 = vshrl.u32 %v1471, 7
        %v1473 = vsub.s32 0, %v1472
        %v1474 = vrot.slane %v1442, %v1473
        %v1476 = vmul.f32 %v1468, %v1474
        %v1477 = vmul.f32 %v1469, %v1474
        %v1479 = vlaneseq
        %v1480 = vshrl.u32 %v1479, 7
        %v1481 = vsub.s32 0, %v1480
        %v1482 = vrot.slane %v1443, %v1481
        %v1484 = vadd.f32 %v1476, %v1482
        %v1485 = vadd.f32 %v1477, %v1482
        %v1486 = vpack.c.bf16 %v1485, %v1484
        %v1487 = vld [vmem:[%s546] sm:$0xf]
        %v1488 = vld [vmem:[%s546 + $0x4] sm:$0xf]
        %v1489 = vld [vmem:[%s546 + $0x8] sm:$0xf]
        %v1490 = vld [vmem:[%s546 + $0xc] sm:$0xf]
        %v1491 = vld [vmem:[%s546 + $0x10] sm:$0xf]
        %v1492 = vld [vmem:[%s546 + $0x14] sm:$0xf]
        %v1493 = vld [vmem:[%s546 + $0x18] sm:$0xf]
        %v1494 = vld [vmem:[%s546 + $0x1c] sm:$0xf]
        %v1495 = vld [vmem:[%s554] sm:$0x1]
        %v1497 = vlaneseq
        %v1498 = vshrl.u32 %v1497, 7
        %v1499 = vsub.s32 0, %v1498
        %v1500 = vrot.slane %v1495, %v1499
        %v1510 = vunpack.c.l.b16 %v1487
        %v1511 = vunpack.c.l.b16 %v1488
        %v1512 = vunpack.c.l.b16 %v1489
        %v1513 = vunpack.c.l.b16 %v1490
        %v1514 = vunpack.c.l.b16 %v1491
        %v1515 = vunpack.c.l.b16 %v1492
        %v1516 = vunpack.c.l.b16 %v1493
        %v1517 = vunpack.c.l.b16 %v1494
        %v1518 = vpack.c.b16 %v1511, %v1510
        %v1519 = vpack.c.b16 %v1513, %v1512
        %v1520 = vpack.c.b16 %v1515, %v1514
        %v1521 = vpack.c.b16 %v1517, %v1516
        %v1527 = vsel %vm693, %v1486, 0
        %1529 = vmatprep.subr.bf16.mxu0 0
        %1530 = vmatpush1.bf16.msra.mxu0 %v1518
        %1531 = vmatprep.subr.bf16.mxu0 0
        %1532 = vmatpush1.bf16.msra.mxu0 %v1519
        %1533 = vmatprep.subr.bf16.mxu0 0
        %1534 = vmatpush1.bf16.msra.mxu0 %v1520
        %1535 = vmatprep.subr.bf16.mxu0 0
        %1536 = vmatpush1.bf16.msra.mxu0 %v1521
        %1537 = vmatprep.subr.bf16.mxu0 0
        %1538 = vmatpush1.bf16.msra.mxu0 0
        %1539 = vmatprep.subr.bf16.mxu0 0
        %1540 = vmatpush1.bf16.msra.mxu0 0
        %1541 = vmatprep.subr.bf16.mxu0 0
        %1542 = vmatpush1.bf16.msra.mxu0 0
        %1543 = vmatprep.subr.bf16.mxu0 0
        %1544 = vmatpush1.bf16.msra.mxu0 0
        %1545 = vmatprep.subr.bf16.mxu0 0
        %1546 = vmatpush1.bf16.msra.mxu0 0
        %1547 = vmatprep.subr.bf16.mxu0 0
        %1548 = vmatpush1.bf16.msra.mxu0 0
        %1549 = vmatprep.subr.bf16.mxu0 0
        %1550 = vmatpush1.bf16.msra.mxu0 0
        %1551 = vmatprep.subr.bf16.mxu0 0
        %1552 = vmatpush1.bf16.msra.mxu0 0
        %1553 = vmatprep.subr.bf16.mxu0 0
        %1554 = vmatpush1.bf16.msra.mxu0 0
        %1555 = vmatprep.subr.bf16.mxu0 0
        %1556 = vmatpush1.bf16.msra.mxu0 0
        %1557 = vmatprep.subr.bf16.mxu0 0
        %1558 = vmatpush1.bf16.msra.mxu0 0
        %1559 = vmatprep.subr.bf16.mxu0 0
        %1560 = vmatpush1.bf16.msra.mxu0 0
        %1561 = vmatprep.mubr.bf16.mxu0 0
        %1562 = vmatmul.mubr.bf16.gmra.mrb[0].mxu0 %v1527
        %v1563 = vpop.f32.mrb[0].mxu0
        %v1564 = vadd.f32 %v1500, %v1563
        %v1565 = vpop.f32.mrb[0].mxu0
        %v1566 = vpop.f32.mrb[0].mxu0
        %v1567 = vadd.f32 %v1500, %v1566
        %v1568 = vpop.f32.mrb[0].mxu0
        %1569 = vdwg.mxu0
        %v1570 = vmul.f32 %v1564, %v1564
        %v1571 = vmul.f32 %v1567, %v1567
        %v1572 = vmul.f32 %v1564, %v1570
        %v1573 = vmul.f32 %v1567, %v1571
        %v1574 = vmul.f32 %v1572, 0.044715
        %v1575 = vmul.f32 %v1573, 0.044715
        %v1576 = vadd.f32 %v1564, %v1574
        %v1577 = vadd.f32 %v1567, %v1575
        %v1578 = vmul.f32 %v1576, 0.7978846
        %v1579 = vmul.f32 %v1577, 0.7978846
        %v1580 = vtanh.pop %v1578
        %v1581 = vtanh.pop %v1579
        %v1582 = vadd.f32 %v1580, 1.0
        %v1583 = vadd.f32 %v1581, 1.0
        %v1584 = vmul.f32 %v1582, 0.5
        %v1585 = vmul.f32 %v1583, 0.5
        %v1586 = vmul.f32 %v1564, %v1584
        %v1587 = vmul.f32 %v1567, %v1585
        %v1588 = vpack.c.bf16 %v1587, %v1586
        %v1589 = vld [vmem:[%s678] sm:$0xf]
        %v1590 = vld [vmem:[%s678 + $0x4] sm:$0xf]
        %v1591 = vld [vmem:[%s678 + $0x8] sm:$0xf]
        %v1592 = vld [vmem:[%s678 + $0xc] sm:$0xf]
        %v1593 = vld [vmem:[%s678 + $0x10] sm:$0xf]
        %v1594 = vld [vmem:[%s678 + $0x14] sm:$0xf]
        %v1595 = vld [vmem:[%s678 + $0x18] sm:$0xf]
        %v1596 = vld [vmem:[%s678 + $0x1c] sm:$0xf]
        %v1597 = vld [vmem:[%s678 + $0x20] sm:$0xf]
        %v1598 = vld [vmem:[%s678 + $0x24] sm:$0xf]
        %v1599 = vld [vmem:[%s678 + $0x28] sm:$0xf]
        %v1600 = vld [vmem:[%s678 + $0x2c] sm:$0xf]
        %v1601 = vld [vmem:[%s678 + $0x30] sm:$0xf]
        %v1602 = vld [vmem:[%s678 + $0x34] sm:$0xf]
        %v1603 = vld [vmem:[%s678 + $0x38] sm:$0xf]
        %v1604 = vld [vmem:[%s678 + $0x3c] sm:$0xf]
        %v1605 = vld [vmem:[%s562] sm:$0x1]
        %v1607 = vlaneseq
        %v1608 = vshrl.u32 %v1607, 7
        %v1609 = vsub.s32 0, %v1608
        %v1610 = vrot.slane %v1605, %v1609
        %v1628 = vunpack.c.l.b16 %v1589
        %v1629 = vunpack.c.l.b16 %v1590
        %v1630 = vunpack.c.l.b16 %v1591
        %v1631 = vunpack.c.l.b16 %v1592
        %v1632 = vunpack.c.l.b16 %v1593
        %v1633 = vunpack.c.l.b16 %v1594
        %v1634 = vunpack.c.l.b16 %v1595
        %v1635 = vunpack.c.l.b16 %v1596
        %v1636 = vunpack.c.l.b16 %v1597
        %v1637 = vunpack.c.l.b16 %v1598
        %v1638 = vunpack.c.l.b16 %v1599
        %v1639 = vunpack.c.l.b16 %v1600
        %v1640 = vunpack.c.l.b16 %v1601
        %v1641 = vunpack.c.l.b16 %v1602
        %v1642 = vunpack.c.l.b16 %v1603
        %v1643 = vunpack.c.l.b16 %v1604
        %v1644 = vpack.c.b16 %v1629, %v1628
        %v1645 = vpack.c.b16 %v1631, %v1630
        %v1646 = vpack.c.b16 %v1633, %v1632
        %v1647 = vpack.c.b16 %v1635, %v1634
        %v1648 = vpack.c.b16 %v1637, %v1636
        %v1649 = vpack.c.b16 %v1639, %v1638
        %v1650 = vpack.c.b16 %v1641, %v1640
        %v1651 = vpack.c.b16 %v1643, %v1642
        %1660 = vmatprep.subr.bf16.mxu0 0
        %1661 = vmatpush1.bf16.msra.mxu0 %v1644
        %1662 = vmatprep.subr.bf16.mxu0 0
        %1663 = vmatpush1.bf16.msra.mxu0 %v1645
        %1664 = vmatprep.subr.bf16.mxu0 0
        %1665 = vmatpush1.bf16.msra.mxu0 %v1646
        %1666 = vmatprep.subr.bf16.mxu0 0
        %1667 = vmatpush1.bf16.msra.mxu0 %v1647
        %1668 = vmatprep.subr.bf16.mxu0 0
        %1669 = vmatpush1.bf16.msra.mxu0 %v1648
        %1670 = vmatprep.subr.bf16.mxu0 0
        %1671 = vmatpush1.bf16.msra.mxu0 %v1649
        %1672 = vmatprep.subr.bf16.mxu0 0
        %1673 = vmatpush1.bf16.msra.mxu0 %v1650
        %1674 = vmatprep.subr.bf16.mxu0 0
        %1675 = vmatpush1.bf16.msra.mxu0 %v1651
        %1676 = vmatprep.subr.bf16.mxu0 0
        %1677 = vmatpush1.bf16.msra.mxu0 0
        %1678 = vmatprep.subr.bf16.mxu0 0
        %1679 = vmatpush1.bf16.msra.mxu0 0
        %1680 = vmatprep.subr.bf16.mxu0 0
        %1681 = vmatpush1.bf16.msra.mxu0 0
        %1682 = vmatprep.subr.bf16.mxu0 0
        %1683 = vmatpush1.bf16.msra.mxu0 0
        %1684 = vmatprep.subr.bf16.mxu0 0
        %1685 = vmatpush1.bf16.msra.mxu0 0
        %1686 = vmatprep.subr.bf16.mxu0 0
        %1687 = vmatpush1.bf16.msra.mxu0 0
        %1688 = vmatprep.subr.bf16.mxu0 0
        %1689 = vmatpush1.bf16.msra.mxu0 0
        %1690 = vmatprep.subr.bf16.mxu0 0
        %1691 = vmatpush1.bf16.msra.mxu0 0
        %1692 = vmatprep.mubr.bf16.mxu0 0
        %1693 = vmatmul.mubr.bf16.gmra.mrb[0].mxu0 %v1588
        %v1694 = vpop.f32.mrb[0].mxu0
        %v1695 = vadd.f32 %v1610, %v1694
        %v1696 = vpop.f32.mrb[0].mxu0
        %v1697 = vpop.f32.mrb[0].mxu0
        %v1698 = vadd.f32 %v1610, %v1697
        %v1699 = vpop.f32.mrb[0].mxu0
        %1700 = vdwg.mxu0
        %v1701 = vadd.f32 %v1440, %v1695
        %v1702 = vadd.f32 %v1441, %v1698
        %1703 = vst.msk [vmem:[%s646] sm:$0xff] %vm693, %v1701
        %1704 = vst.msk [vmem:[%s646 + $0x8] sm:$0xff] %vm693, %v1702
        %s1705 = sand.u32 %s367, 1
        %s1706 = scalar_lea.sflag [#allocation4], %s1705
        %s1707 = sand.u32 %s367, 1
        %s1708 = smul.addr %s1707, 16
        %s1709 = scalar_lea.vmem [#allocation10], %s1708
        // Predicated region
        $region89: #{transformer_forward.1} parent=67 // pred_check
          %p1710 = pneg %p377
        $region90: #{transformer_forward.1} parent=67 // pred_check_branch
          %1712 = sbr.rel (%p1710) target = $region92
        $region91: #{transformer_forward.1} parent=67 // pred_region
          %s1714 = ssub.s32 256, 256
          %1715 = vsyncadd %s1706, %s1714
          %s1716 = smul.addr %s39, 2
          %s1717 = smul.addr %s1716, 128
          %s1718 = scalar_lea.hbm %s12, %s1717
          %s1719 = sshll.u32 %s1709, 4
          %s1720 = int_to_ptr.vmem [resolvable:$true] %s1719
          %1725 = dma.vmem_to_hbm [thread:$0]  %s1720, 256, %s1718, %s1706, 128, 128, 8
        $region92: #{transformer_forward.1} parent=67 // pred_fallthru
          _
      $region68: #{transformer_forward.1} parent=5 // pred_fallthru
        _
      %p1726 = scmp.le.s32.totalorder 2, %s30
      // Predicated region
      $region93: #{transformer_forward.1} parent=5 // pred_check
        %p1727 = pneg %p1726
      $region94: #{transformer_forward.1} parent=5 // pred_check_branch
        %1729 = sbr.rel (%p1727) target = $region96
      $region95: #{transformer_forward.1} parent=5 // pred_region
        %s1730 = ssub.s32 %s30, 2
        // Predicated region
        $region97: #{transformer_forward.1} parent=95 // pred_check
          %p1731 = pneg %p383
        $region98: #{transformer_forward.1} parent=95 // pred_check_branch
          %1733 = sbr.rel (%p1731) target = $region100
        $region99: #{transformer_forward.1} parent=95 // pred_region
          %s1734 = sand.u32 %s368, 1
          %s1735 = scalar_lea.sflag [#allocation4], %s1734
          %s1736 = sand.u32 %s368, 1
          %s1737 = smul.addr %s1736, 16
          %s1738 = scalar_lea.vmem [#allocation10], %s1737
          %1739 = dma.done %s1735, 256
        $region100: #{transformer_forward.1} parent=95 // pred_fallthru
          _
      $region96: #{transformer_forward.1} parent=5 // pred_fallthru
        _
    $region6: #{transformer_forward.1} parent=1 // loop_footer
      %s34 = sadd.s32 1, %s30
    $region7: #{transformer_forward.1} parent=1 // loop_footer_branch
      %29 = sbr.rel target = $region3
    $region8: #{transformer_forward.1} parent=1 // loop_exit
      _
    %1740 = vsyncpa [#allocation3], 1
    %s1741 = scalar_lea.sflag [#allocation3], 1
    %1742 = vsyncpa %s1741, 1
    %1743 = vsyncpa [#allocation6], 1
    %s1744 = scalar_lea.sflag [#allocation6], 1
    %1745 = vsyncpa %s1744, 1
    %1746 = vsyncpa [#allocation9], 1
    %s1747 = scalar_lea.sflag [#allocation9], 1
    %1748 = vsyncpa %s1747, 1
    %1749 = vsyncpa [#allocation4], 1
    %s1750 = scalar_lea.sflag [#allocation4], 1
    %1751 = vsyncpa %s1750, 1

</llo_original>
